<compile_context>
chip_gen: v7x
topology: tpu7x:2x2x1
jax: 0.10.0
libtpu: 0.0.40
codegen_flags: <defaults>
</compile_context>

<pallas_src>
import functools

import jax
import jax.numpy as jnp
import numpy as np
from jax.experimental import pallas as pl
from jax.experimental.pallas import tpu as pltpu


# ----------------------------------------------------------------------------
# Pallas kernel: one grid step == (one batch block, one chunk of T_CHUNK steps)
# ----------------------------------------------------------------------------
def ecg_kernel(zproj_ref, xpast_ref, ecin_ref,
               wg1x_ref, wg2_ref, bg2_ref, wg3_ref, bg3_ref,
               wc1_ref, bc1_ref, wc2_ref, bc2_ref, wc3_ref, bc3_ref,
               xfake_ref, xfakeec_ref,
               win,
               *, P, D, H1, T_CHUNK, TN, ag1, ag2, ac1, ac2):
    c = pl.program_id(1)                              # time-chunk ("arbitrary")
    f32, bf16 = jnp.float32, jnp.bfloat16

    def prelu(x, a):                                  # element-wise in f32
        return jnp.where(x >= 0.0, x, a * x)

    def mm(x, w):                                     # bf16 MXU, f32 accumulation
        return jnp.dot(x.astype(bf16), w, preferred_element_type=f32)

    # ResConv1d EC on the flat circular window: each conv layer is one matmul
    # against a block-banded, rotation-adjusted (P*Cin, P*Cout) weight.
    def ec_net(xflat):
        h1 = prelu(mm(xflat, wc1_ref[...]) + bc1_ref[...], ac1)
        h2 = h1 + prelu(mm(h1, wc2_ref[...]) + bc2_ref[...], ac2)
        return mm(h2, wc3_ref[...]) + bc3_ref[...]

    # ---- chunk 0: load both initial windows (canonical order == rotation 0) --
    @pl.when(c == 0)
    def _init():
        win[:TN, :] = xpast_ref[...]                  # no-EC branch window
        win[TN:, :] = ecin_ref[...]                   # EC branch: x_past + EC(x_past)

    # ---- T_CHUNK generation steps, fully unrolled ----------------------------
    # T_CHUNK % P == 0 and every chunk starts at a multiple of P, so
    # (t % P) == (tl % P) is STATIC inside the unrolled loop.
    # TODO(synk): if bundle dumps show vreg spills at very large TN, move the
    #             non-EC steps into lax.fori_loop(..., unroll=True).
    for tl in range(T_CHUNK):
        r = tl % P                                    # rotation == slot to overwrite

        W = win[...]                                  # (2TN, P*D) f32, fused branches
        zp = zproj_ref[tl]                            # (TN, H1) bf16 (z@wg1[:L]+bg1)
        pre = mm(W, wg1x_ref[r])                      # rotation-matched first layer
        pre = (pre.reshape(2, TN, H1) + zp.astype(f32)[None]).reshape(2 * TN, H1)
        h1 = prelu(pre, ag1)                          # no residual (in_dim != H1)
        h2 = h1 + prelu(mm(h1, wg2_ref[...]) + bg2_ref[...], ag2)
        x_gen = mm(h2, wg3_ref[...]) + bg3_ref[...]   # (2TN, D) f32

        xfake_ref[:, tl * D:(tl + 1) * D] = x_gen[:TN]
        xfakeec_ref[:, tl * D:(tl + 1) * D] = x_gen[TN:]

        # circular-buffer update: overwrite the oldest slot — no shift/roll.
        win[:, r * D:(r + 1) * D] = x_gen

        if r == 0:                                    # EC every P steps (static)
            wec = win[TN:, :]
            win[TN:, :] = wec + ec_net(wec)


# ----------------------------------------------------------------------------
# Wrapper-side weight preparation helpers (rotation baked into the weights)
# ----------------------------------------------------------------------------
def _rotated_rows(w, P, blk, r):
    """Row-block permutation: output block s takes canonical block (s - r) % P."""
    return jnp.concatenate(
        [w[((s - r) % P) * blk:((s - r) % P + 1) * blk] for s in range(P)], axis=0)


def _banded_conv_weight(w_taps, P, r):
    """Block-banded Conv1d(k=3, pad=1) weight in rotation-r circular layout."""
    _, cin, cout = w_taps.shape
    zero = jnp.zeros((cin, cout), w_taps.dtype)
    rows = []
    for s_in in range(P):
        l = (s_in - r) % P
        row = []
        for s_out in range(P):
            m = (s_out - r) % P
            k = l - m + 1                              # tap index; |l - m| <= 1
            row.append(w_taps[k] if 0 <= k <= 2 else zero)
        rows.append(jnp.concatenate(row, axis=1))
    return jnp.concatenate(rows, axis=0)               # (P*Cin, P*Cout)


# ----------------------------------------------------------------------------
# Wrapper: tiling, weight prep, pallas_call
# ----------------------------------------------------------------------------
def ecg_forward_pallas(z, x_past, prm):
    N, q, L = z.shape
    _, P, D = x_past.shape
    H1, H2 = prm["wg2"].shape
    assert H1 == H2, "residual blocks require hidden_dims[0] == hidden_dims[1]"
    f32, bf16 = jnp.float32, jnp.bfloat16

    # one-shot EC(x_past) -> ec_input (tiny (N,P,D) op; also a returned output)
    ec_input = x_past + _ec_ref(x_past, prm)

    # ---- tiling ---------------------------------------------------------------
    N8 = ((N + 7) // 8) * 8
    if N8 >= 512:
        TN = 256
    elif N8 >= 16:                                     # split so the "parallel" axis
        TN = ((N8 // 2 + 7) // 8) * 8                  # spans both v7x TensorCores
    else:
        TN = N8
    N_pad = ((N + TN - 1) // TN) * TN
    NB = N_pad // TN

    reps = max(1, 16 // P)                             # ~16 steps/chunk, multiple of P
    reps = min(reps, -(-q // P))
    T_CHUNK = reps * P
    NC = -(-q // T_CHUNK)
    q_pad = NC * T_CHUNK

    col = T_CHUNK * D                                  # per-chunk output lane width
    CPAD = col if (NC == 1 or col % 128 == 0) else ((col + 127) // 128) * 128

    # ---- weight / input prep --------------------------------------------------
    wg1 = prm["wg1"]
    zproj = jnp.einsum("nql,lh->qnh", z, wg1[:L]) + prm["bg1"]       # (q, N, H1)
    zproj = jnp.pad(zproj, ((0, q_pad - q), (0, N_pad - N), (0, 0))).astype(bf16)

    wg1x = wg1[L:]                                                    # (P*D, H1)
    wg1x_stack = jnp.stack([_rotated_rows(wg1x, P, D, r)
                            for r in range(P)]).astype(bf16)          # (P, P*D, H1)

    r_ec = 1 % P                                       # circular rotation at EC time
    wb1 = _banded_conv_weight(prm["wc1"], P, r_ec).astype(bf16)
    wb2 = _banded_conv_weight(prm["wc2"], P, r_ec).astype(bf16)
    wb3 = _banded_conv_weight(prm["wc3"], P, r_ec).astype(bf16)
    bc1t = jnp.tile(prm["bc1"].astype(f32), (1, P))
    bc2t = jnp.tile(prm["bc2"].astype(f32), (1, P))
    bc3t = jnp.tile(prm["bc3"].astype(f32), (1, P))

    xp_flat = jnp.pad(x_past.reshape(N, P * D).astype(f32), ((0, N_pad - N), (0, 0)))
    ec_flat = jnp.pad(ec_input.reshape(N, P * D).astype(f32), ((0, N_pad - N), (0, 0)))

    weights = [wg1x_stack, prm["wg2"].astype(bf16), prm["bg2"].astype(f32),
               prm["wg3"].astype(bf16), prm["bg3"].astype(f32),
               wb1, bc1t, wb2, bc2t, wb3, bc3t]

    def full_spec(a):
        nd = a.ndim
        return pl.BlockSpec(a.shape, lambda b, c, _nd=nd: (0,) * _nd)

    in_specs = ([pl.BlockSpec((T_CHUNK, TN, H1), lambda b, c: (c, b, 0)),   # zproj
                 pl.BlockSpec((TN, P * D), lambda b, c: (b, 0)),            # x_past
                 pl.BlockSpec((TN, P * D), lambda b, c: (b, 0))]            # ec_input
                + [full_spec(w) for w in weights])

    out_shape = (jax.ShapeDtypeStruct((N_pad, NC * CPAD), f32),   # x_fake
                 jax.ShapeDtypeStruct((N_pad, NC * CPAD), f32))   # x_fake_ec
    out_specs = (pl.BlockSpec((TN, CPAD), lambda b, c: (b, c)),
                 pl.BlockSpec((TN, CPAD), lambda b, c: (b, c)))

    kernel = functools.partial(
        ecg_kernel, P=P, D=D, H1=H1, T_CHUNK=T_CHUNK, TN=TN,
        ag1=float(prm["ag1"]), ag2=float(prm["ag2"]),
        ac1=float(prm["ac1"]), ac2=float(prm["ac2"]))

    # Only raise the scoped VMEM limit when the tiles actually need it
    # (large production sizes on v6e); keep the default otherwise (v7x-safe).
    weight_bytes = sum(int(w.size) * w.dtype.itemsize for w in weights)
    vmem_est = (2 * T_CHUNK * TN * H1 * 2 + 2 * 2 * TN * P * D * 4
                + 2 * weight_bytes + 2 * 2 * TN * CPAD * 4 + 2 * TN * P * D * 4)
    cp = dict(dimension_semantics=("parallel", "arbitrary"))
    if vmem_est > 30 * 1024 * 1024:
        cp["vmem_limit_bytes"] = int(min(vmem_est * 2, 100 * 1024 * 1024))

    xfake2d, xfakeec2d = pl.pallas_call(
        kernel,
        out_shape=out_shape,
        grid_spec=pltpu.PrefetchScalarGridSpec(
            num_scalar_prefetch=0,
            grid=(NB, NC),                              # (batch blocks, time chunks)
            in_specs=in_specs,
            out_specs=out_specs,
            scratch_shapes=[pltpu.VMEM((2 * TN, P * D), f32)]),   # merged window
        compiler_params=pltpu.CompilerParams(**cp),
    )(zproj, xp_flat, ec_flat, *weights)

    def unpack(o):
        if CPAD != col:
            o = o.reshape(N_pad, NC, CPAD)[:, :, :col]
        return o.reshape(N_pad, q_pad, D)[:N, :q]

    return unpack(xfake2d), unpack(xfakeec2d), ec_input


# ----------------------------------------------------------------------------
# Pure-JAX reference (mirrors the PyTorch module) for validation
# ----------------------------------------------------------------------------
def _prelu(x, a):
    return jnp.where(x >= 0.0, x, a * x)


def _resfnn_ref(x, prm):
    h1 = _prelu(x @ prm["wg1"] + prm["bg1"], prm["ag1"])
    h2 = h1 + _prelu(h1 @ prm["wg2"] + prm["bg2"], prm["ag2"])
    return h2 @ prm["wg3"] + prm["bg3"]


def _conv1d_ref(x, w, b):                              # x: (N, L, Cin)
    L = x.shape[1]
    xp = jnp.pad(x, ((0, 0), (1, 1), (0, 0)))
    cols = [sum(xp[:, l + kk, :] @ w[kk] for kk in range(3)) + b for l in range(L)]
    return jnp.stack(cols, axis=1)


def _ec_ref(x3, prm):
    h1 = _prelu(_conv1d_ref(x3, prm["wc1"], prm["bc1"]), prm["ac1"])
    h2 = h1 + _prelu(_conv1d_ref(h1, prm["wc2"], prm["bc2"]), prm["ac2"])
    return _conv1d_ref(h2, prm["wc3"], prm["bc3"])


def _generate_ref(z, x_past, prm, use_ec, P):
    N, q, _ = z.shape
    gen = []
    for t in range(q):
        x_in = jnp.concatenate([z[:, t, :], x_past.reshape(N, -1)], axis=-1)
        x_gen = _resfnn_ref(x_in, prm)
        x_past = jnp.concatenate([x_past[:, 1:], x_gen[:, None, :]], axis=1)
        gen.append(x_gen)
        if t % P == 0 and use_ec:
            x_past = x_past + _ec_ref(x_past, prm)
    return jnp.stack(gen, axis=1)


def _forward_ref(z, x_past, prm, P):
    ec_input = x_past + _ec_ref(x_past, prm)
    x_fake_ec = _generate_ref(z, ec_input, prm, True, P)
    x_fake = _generate_ref(z, x_past, prm, False, P)
    return x_fake, x_fake_ec, ec_input


# ----------------------------------------------------------------------------
# Deterministic parameter init (shapes implied by ECG.__init__)
# ----------------------------------------------------------------------------
def init_params(key, dim, p, latent, hidden):
    h1, h2 = hidden
    assert h1 == h2, "second residual block requires equal hidden dims"
    in_dim = dim * p + latent
    ks = jax.random.split(key, 12)
    s = 0.1

    def rn(k, shape):
        return s * jax.random.normal(k, shape, jnp.float32)

    return dict(
        # ResFNN G
        wg1=rn(ks[0], (in_dim, h1)), bg1=rn(ks[1], (1, h1)),
        wg2=rn(ks[2], (h1, h2)),     bg2=rn(ks[3], (1, h2)),
        wg3=rn(ks[4], (h2, dim)),    bg3=rn(ks[5], (1, dim)),
        # ResConv1d EC (taps, Cin, Cout)
        wc1=rn(ks[6], (3, dim, h1)), bc1=rn(ks[7], (1, h1)),
        wc2=rn(ks[8], (3, h1, h2)),  bc2=rn(ks[9], (1, h2)),
        wc3=rn(ks[10], (3, h2, dim)), bc3=rn(ks[11], (1, dim)),
        # PReLU slopes (PyTorch default init 0.25)
        ag1=0.25, ag2=0.25, ac1=0.25, ac2=0.25,
    )


if __name__ == "__main__":
    dim, p, q, latent = 4, 3, 6, 4
    hidden = (32, 32)
    N = 2

    key = jax.random.PRNGKey(0)
    kz, kx, kp = jax.random.split(key, 3)
    z = jax.random.normal(kz, (N, q, latent), jnp.float32)
    x_past = jax.random.normal(kx, (N, p, dim), jnp.float32)
    prm = init_params(kp, dim, p, latent, hidden)

    x_fake, x_fake_ec, ec_input = ecg_forward_pallas(z, x_past, prm)
    jax.block_until_ready((x_fake, x_fake_ec, ec_input))

    rf, rfe, rec = _forward_ref(z, x_past, prm, p)
    assert x_fake.shape == (N, q, dim) and x_fake_ec.shape == (N, q, dim)
    assert ec_input.shape == (N, p, dim)
    np.testing.assert_allclose(np.asarray(x_fake), np.asarray(rf), atol=2e-2, rtol=2e-2)
    np.testing.assert_allclose(np.asarray(x_fake_ec), np.asarray(rfe), atol=2e-2, rtol=2e-2)
    np.testing.assert_allclose(np.asarray(ec_input), np.asarray(rec), atol=2e-2, rtol=2e-2)

    print("KERNEL_OK")
</pallas_src>

<mosaic_0001>
module attributes {stable_mosaic.version = 11 : i64} {
  func.func @ecg_kernel(%arg0: i32, %arg1: i32, %arg2: memref<6x8x32xbf16, #tpu.memory_space<vmem>>, %arg3: memref<8x12xf32, #tpu.memory_space<vmem>>, %arg4: memref<8x12xf32, #tpu.memory_space<vmem>>, %arg5: memref<3x12x32xbf16, #tpu.memory_space<vmem>>, %arg6: memref<32x32xbf16, #tpu.memory_space<vmem>>, %arg7: memref<1x32xf32, #tpu.memory_space<vmem>>, %arg8: memref<32x4xbf16, #tpu.memory_space<vmem>>, %arg9: memref<1x4xf32, #tpu.memory_space<vmem>>, %arg10: memref<12x96xbf16, #tpu.memory_space<vmem>>, %arg11: memref<1x96xf32, #tpu.memory_space<vmem>>, %arg12: memref<96x96xbf16, #tpu.memory_space<vmem>>, %arg13: memref<1x96xf32, #tpu.memory_space<vmem>>, %arg14: memref<96x12xbf16, #tpu.memory_space<vmem>>, %arg15: memref<1x12xf32, #tpu.memory_space<vmem>>, %arg16: memref<8x24xf32, #tpu.memory_space<vmem>>, %arg17: memref<8x24xf32, #tpu.memory_space<vmem>>, %arg18: memref<16x12xf32, #tpu.memory_space<vmem>>) attributes {dimension_semantics = [#tpu.dimension_semantics<parallel>, #tpu.dimension_semantics<arbitrary>], iteration_bounds = array<i64: 1, 1>, scalar_prefetch = 0 : i64, scratch_operands = 1 : i64, tpu.core_type = #tpu.core_type<tc>, window_params = [{transform_indices = @transform_0, window_bounds = array<i64: 6, 8, 32>}, {transform_indices = @transform_1, window_bounds = array<i64: 8, 12>}, {transform_indices = @transform_2, window_bounds = array<i64: 8, 12>}, {pipeline_mode = #tpu.pipeline_mode<synchronous>, transform_indices = @transform_3, window_bounds = array<i64: 3, 12, 32>}, {pipeline_mode = #tpu.pipeline_mode<synchronous>, transform_indices = @transform_4, window_bounds = array<i64: 32, 32>}, {pipeline_mode = #tpu.pipeline_mode<synchronous>, transform_indices = @transform_5, window_bounds = array<i64: 1, 32>}, {pipeline_mode = #tpu.pipeline_mode<synchronous>, transform_indices = @transform_6, window_bounds = array<i64: 32, 4>}, {pipeline_mode = #tpu.pipeline_mode<synchronous>, transform_indices = @transform_7, window_bounds = array<i64: 1, 4>}, {pipeline_mode = #tpu.pipeline_mode<synchronous>, transform_indices = @transform_8, window_bounds = array<i64: 12, 96>}, {pipeline_mode = #tpu.pipeline_mode<synchronous>, transform_indices = @transform_9, window_bounds = array<i64: 1, 96>}, {pipeline_mode = #tpu.pipeline_mode<synchronous>, transform_indices = @transform_10, window_bounds = array<i64: 96, 96>}, {pipeline_mode = #tpu.pipeline_mode<synchronous>, transform_indices = @transform_11, window_bounds = array<i64: 1, 96>}, {pipeline_mode = #tpu.pipeline_mode<synchronous>, transform_indices = @transform_12, window_bounds = array<i64: 96, 12>}, {pipeline_mode = #tpu.pipeline_mode<synchronous>, transform_indices = @transform_13, window_bounds = array<i64: 1, 12>}, {transform_indices = @transform_14, window_bounds = array<i64: 8, 24>}, {transform_indices = @transform_15, window_bounds = array<i64: 8, 24>}]} {
    %c0_i32 = arith.constant 0 : i32
    %0 = arith.cmpi eq, %arg1, %c0_i32 : i32
    %1 = arith.extui %0 : i1 to i32
    %c0_i32_0 = arith.constant 0 : i32
    %2 = arith.cmpi ne, %1, %c0_i32_0 : i32
    scf.if %2 {
      %c0_210 = arith.constant 0 : index
      %c0_211 = arith.constant 0 : index
      %313 = vector.load %arg3[%c0_210, %c0_211] : memref<8x12xf32, #tpu.memory_space<vmem>>, vector<8x12xf32>
      %c0_212 = arith.constant 0 : index
      %c0_213 = arith.constant 0 : index
      %314 = vector.load %arg18[%c0_212, %c0_213] : memref<16x12xf32, #tpu.memory_space<vmem>>, vector<8x12xf32>
      tpu.vector_store %arg18[%c0_212, %c0_213], %313 {strides = array<i32>} : memref<16x12xf32, #tpu.memory_space<vmem>>, vector<8x12xf32>,
      %c0_214 = arith.constant 0 : index
      %c0_215 = arith.constant 0 : index
      %315 = vector.load %arg4[%c0_214, %c0_215] : memref<8x12xf32, #tpu.memory_space<vmem>>, vector<8x12xf32>
      %c8_216 = arith.constant 8 : index
      %c0_217 = arith.constant 0 : index
      %316 = vector.load %arg18[%c8_216, %c0_217] : memref<16x12xf32, #tpu.memory_space<vmem>>, vector<8x12xf32>
      tpu.vector_store %arg18[%c8_216, %c0_217], %315 {strides = array<i32>} : memref<16x12xf32, #tpu.memory_space<vmem>>, vector<8x12xf32>,
    } else {
    }
    %c0 = arith.constant 0 : index
    %c0_1 = arith.constant 0 : index
    %3 = vector.load %arg18[%c0, %c0_1] : memref<16x12xf32, #tpu.memory_space<vmem>>, vector<16x12xf32>
    %c0_2 = arith.constant 0 : index
    %c0_3 = arith.constant 0 : index
    %c0_4 = arith.constant 0 : index
    %4 = vector.load %arg2[%c0_2, %c0_3, %c0_4] : memref<6x8x32xbf16, #tpu.memory_space<vmem>>, vector<1x8x32xbf16>
    %5 = vector.shape_cast %4 : vector<1x8x32xbf16> to vector<8x32xbf16>
    %c0_5 = arith.constant 0 : index
    %c0_6 = arith.constant 0 : index
    %c0_7 = arith.constant 0 : index
    %6 = vector.load %arg5[%c0_5, %c0_6, %c0_7] : memref<3x12x32xbf16, #tpu.memory_space<vmem>>, vector<1x12x32xbf16>
    %7 = vector.shape_cast %6 : vector<1x12x32xbf16> to vector<12x32xbf16>
    %8 = arith.truncf %3 : vector<16x12xf32> to vector<16x12xbf16>
    %cst = arith.constant dense<0.000000e+00> : vector<16x32xf32>
    %9 = tpu.matmul %8, %7, %cst {dimension_numbers = #tpu.dot_dimension_numbers<[1], [0], [0], [1], [0, 0, 1, 1], [], []>} : vector<16x12xbf16>, vector<12x32xbf16>, vector<16x32xf32> -> vector<16x32xf32>
    %10 = vector.shape_cast %9 : vector<16x32xf32> to vector<2x8x32xf32>
    %11 = arith.extf %5 : vector<8x32xbf16> to vector<8x32xf32>
    %12 = vector.shape_cast %11 : vector<8x32xf32> to vector<1x8x32xf32>
    %13 = vector.broadcast %12 : vector<1x8x32xf32> to vector<2x8x32xf32>
    %14 = arith.addf %10, %13 : vector<2x8x32xf32>
    %15 = vector.shape_cast %14 : vector<2x8x32xf32> to vector<16x32xf32>
    %cst_8 = arith.constant 0.000000e+00 : f32
    %16 = vector.broadcast %cst_8 : f32 to vector<16x32xf32>
    %17 = arith.cmpf oge, %15, %16 : vector<16x32xf32>
    %cst_9 = arith.constant 2.500000e-01 : f32
    %18 = vector.broadcast %cst_9 : f32 to vector<16x32xf32>
    %19 = arith.mulf %18, %15 : vector<16x32xf32>
    %20 = arith.select %17, %15, %19 : vector<16x32xi1>, vector<16x32xf32>
    %c0_10 = arith.constant 0 : index
    %c0_11 = arith.constant 0 : index
    %21 = vector.load %arg6[%c0_10, %c0_11] : memref<32x32xbf16, #tpu.memory_space<vmem>>, vector<32x32xbf16>
    %22 = arith.truncf %20 : vector<16x32xf32> to vector<16x32xbf16>
    %cst_12 = arith.constant dense<0.000000e+00> : vector<16x32xf32>
    %23 = tpu.matmul %22, %21, %cst_12 {dimension_numbers = #tpu.dot_dimension_numbers<[1], [0], [0], [1], [0, 0, 1, 1], [], []>} : vector<16x32xbf16>, vector<32x32xbf16>, vector<16x32xf32> -> vector<16x32xf32>
    %c0_13 = arith.constant 0 : index
    %c0_14 = arith.constant 0 : index
    %24 = vector.load %arg7[%c0_13, %c0_14] : memref<1x32xf32, #tpu.memory_space<vmem>>, vector<1x32xf32>
    %25 = vector.broadcast %24 : vector<1x32xf32> to vector<16x32xf32>
    %26 = arith.addf %23, %25 : vector<16x32xf32>
    %cst_15 = arith.constant 0.000000e+00 : f32
    %27 = vector.broadcast %cst_15 : f32 to vector<16x32xf32>
    %28 = arith.cmpf oge, %26, %27 : vector<16x32xf32>
    %cst_16 = arith.constant 2.500000e-01 : f32
    %29 = vector.broadcast %cst_16 : f32 to vector<16x32xf32>
    %30 = arith.mulf %29, %26 : vector<16x32xf32>
    %31 = arith.select %28, %26, %30 : vector<16x32xi1>, vector<16x32xf32>
    %32 = arith.addf %20, %31 : vector<16x32xf32>
    %c0_17 = arith.constant 0 : index
    %c0_18 = arith.constant 0 : index
    %33 = vector.load %arg8[%c0_17, %c0_18] : memref<32x4xbf16, #tpu.memory_space<vmem>>, vector<32x4xbf16>
    %34 = arith.truncf %32 : vector<16x32xf32> to vector<16x32xbf16>
    %cst_19 = arith.constant dense<0.000000e+00> : vector<16x4xf32>
    %35 = tpu.matmul %34, %33, %cst_19 {dimension_numbers = #tpu.dot_dimension_numbers<[1], [0], [0], [1], [0, 0, 1, 1], [], []>} : vector<16x32xbf16>, vector<32x4xbf16>, vector<16x4xf32> -> vector<16x4xf32>
    %c0_20 = arith.constant 0 : index
    %c0_21 = arith.constant 0 : index
    %36 = vector.load %arg9[%c0_20, %c0_21] : memref<1x4xf32, #tpu.memory_space<vmem>>, vector<1x4xf32>
    %37 = vector.broadcast %36 : vector<1x4xf32> to vector<16x4xf32>
    %38 = arith.addf %35, %37 : vector<16x4xf32>
    %39 = vector.extract_strided_slice %38 {offsets = [0, 0], sizes = [8, 4], strides = [1, 1]} : vector<16x4xf32> to vector<8x4xf32>
    %c0_22 = arith.constant 0 : index
    %c0_23 = arith.constant 0 : index
    %40 = vector.load %arg16[%c0_22, %c0_23] : memref<8x24xf32, #tpu.memory_space<vmem>>, vector<8x4xf32>
    tpu.vector_store %arg16[%c0_22, %c0_23], %39 {strides = array<i32>} : memref<8x24xf32, #tpu.memory_space<vmem>>, vector<8x4xf32>,
    %41 = vector.extract_strided_slice %38 {offsets = [8, 0], sizes = [8, 4], strides = [1, 1]} : vector<16x4xf32> to vector<8x4xf32>
    %c0_24 = arith.constant 0 : index
    %c0_25 = arith.constant 0 : index
    %42 = vector.load %arg17[%c0_24, %c0_25] : memref<8x24xf32, #tpu.memory_space<vmem>>, vector<8x4xf32>
    tpu.vector_store %arg17[%c0_24, %c0_25], %41 {strides = array<i32>} : memref<8x24xf32, #tpu.memory_space<vmem>>, vector<8x4xf32>,
    %c0_26 = arith.constant 0 : index
    %c0_27 = arith.constant 0 : index
    %43 = vector.load %arg18[%c0_26, %c0_27] : memref<16x12xf32, #tpu.memory_space<vmem>>, vector<16x4xf32>
    tpu.vector_store %arg18[%c0_26, %c0_27], %38 {strides = array<i32>} : memref<16x12xf32, #tpu.memory_space<vmem>>, vector<16x4xf32>,
    %c8 = arith.constant 8 : index
    %c0_28 = arith.constant 0 : index
    %44 = vector.load %arg18[%c8, %c0_28] : memref<16x12xf32, #tpu.memory_space<vmem>>, vector<8x12xf32>
    %c0_29 = arith.constant 0 : index
    %c0_30 = arith.constant 0 : index
    %45 = vector.load %arg10[%c0_29, %c0_30] : memref<12x96xbf16, #tpu.memory_space<vmem>>, vector<12x96xbf16>
    %46 = arith.truncf %44 : vector<8x12xf32> to vector<8x12xbf16>
    %cst_31 = arith.constant dense<0.000000e+00> : vector<8x96xf32>
    %47 = tpu.matmul %46, %45, %cst_31 {dimension_numbers = #tpu.dot_dimension_numbers<[1], [0], [0], [1], [0, 0, 1, 1], [], []>} : vector<8x12xbf16>, vector<12x96xbf16>, vector<8x96xf32> -> vector<8x96xf32>
    %c0_32 = arith.constant 0 : index
    %c0_33 = arith.constant 0 : index
    %48 = vector.load %arg11[%c0_32, %c0_33] : memref<1x96xf32, #tpu.memory_space<vmem>>, vector<1x96xf32>
    %49 = vector.broadcast %48 : vector<1x96xf32> to vector<8x96xf32>
    %50 = arith.addf %47, %49 : vector<8x96xf32>
    %cst_34 = arith.constant 0.000000e+00 : f32
    %51 = vector.broadcast %cst_34 : f32 to vector<8x96xf32>
    %52 = arith.cmpf oge, %50, %51 : vector<8x96xf32>
    %cst_35 = arith.constant 2.500000e-01 : f32
    %53 = vector.broadcast %cst_35 : f32 to vector<8x96xf32>
    %54 = arith.mulf %53, %50 : vector<8x96xf32>
    %55 = arith.select %52, %50, %54 : vector<8x96xi1>, vector<8x96xf32>
    %c0_36 = arith.constant 0 : index
    %c0_37 = arith.constant 0 : index
    %56 = vector.load %arg12[%c0_36, %c0_37] : memref<96x96xbf16, #tpu.memory_space<vmem>>, vector<96x96xbf16>
    %57 = arith.truncf %55 : vector<8x96xf32> to vector<8x96xbf16>
    %cst_38 = arith.constant dense<0.000000e+00> : vector<8x96xf32>
    %58 = tpu.matmul %57, %56, %cst_38 {dimension_numbers = #tpu.dot_dimension_numbers<[1], [0], [0], [1], [0, 0, 1, 1], [], []>} : vector<8x96xbf16>, vector<96x96xbf16>, vector<8x96xf32> -> vector<8x96xf32>
    %c0_39 = arith.constant 0 : index
    %c0_40 = arith.constant 0 : index
    %59 = vector.load %arg13[%c0_39, %c0_40] : memref<1x96xf32, #tpu.memory_space<vmem>>, vector<1x96xf32>
    %60 = vector.broadcast %59 : vector<1x96xf32> to vector<8x96xf32>
    %61 = arith.addf %58, %60 : vector<8x96xf32>
    %cst_41 = arith.constant 0.000000e+00 : f32
    %62 = vector.broadcast %cst_41 : f32 to vector<8x96xf32>
    %63 = arith.cmpf oge, %61, %62 : vector<8x96xf32>
    %cst_42 = arith.constant 2.500000e-01 : f32
    %64 = vector.broadcast %cst_42 : f32 to vector<8x96xf32>
    %65 = arith.mulf %64, %61 : vector<8x96xf32>
    %66 = arith.select %63, %61, %65 : vector<8x96xi1>, vector<8x96xf32>
    %67 = arith.addf %55, %66 : vector<8x96xf32>
    %c0_43 = arith.constant 0 : index
    %c0_44 = arith.constant 0 : index
    %68 = vector.load %arg14[%c0_43, %c0_44] : memref<96x12xbf16, #tpu.memory_space<vmem>>, vector<96x12xbf16>
    %69 = arith.truncf %67 : vector<8x96xf32> to vector<8x96xbf16>
    %cst_45 = arith.constant dense<0.000000e+00> : vector<8x12xf32>
    %70 = tpu.matmul %69, %68, %cst_45 {dimension_numbers = #tpu.dot_dimension_numbers<[1], [0], [0], [1], [0, 0, 1, 1], [], []>} : vector<8x96xbf16>, vector<96x12xbf16>, vector<8x12xf32> -> vector<8x12xf32>
    %c0_46 = arith.constant 0 : index
    %c0_47 = arith.constant 0 : index
    %71 = vector.load %arg15[%c0_46, %c0_47] : memref<1x12xf32, #tpu.memory_space<vmem>>, vector<1x12xf32>
    %72 = vector.broadcast %71 : vector<1x12xf32> to vector<8x12xf32>
    %73 = arith.addf %70, %72 : vector<8x12xf32>
    %74 = arith.addf %44, %73 : vector<8x12xf32>
    %c8_48 = arith.constant 8 : index
    %c0_49 = arith.constant 0 : index
    %75 = vector.load %arg18[%c8_48, %c0_49] : memref<16x12xf32, #tpu.memory_space<vmem>>, vector<8x12xf32>
    tpu.vector_store %arg18[%c8_48, %c0_49], %74 {strides = array<i32>} : memref<16x12xf32, #tpu.memory_space<vmem>>, vector<8x12xf32>,
    %c0_50 = arith.constant 0 : index
    %c0_51 = arith.constant 0 : index
    %76 = vector.load %arg18[%c0_50, %c0_51] : memref<16x12xf32, #tpu.memory_space<vmem>>, vector<16x12xf32>
    %c1 = arith.constant 1 : index
    %c0_52 = arith.constant 0 : index
    %c0_53 = arith.constant 0 : index
    %77 = vector.load %arg2[%c1, %c0_52, %c0_53] : memref<6x8x32xbf16, #tpu.memory_space<vmem>>, vector<1x8x32xbf16>
    %78 = vector.shape_cast %77 : vector<1x8x32xbf16> to vector<8x32xbf16>
    %c1_54 = arith.constant 1 : index
    %c0_55 = arith.constant 0 : index
    %c0_56 = arith.constant 0 : index
    %79 = vector.load %arg5[%c1_54, %c0_55, %c0_56] : memref<3x12x32xbf16, #tpu.memory_space<vmem>>, vector<1x12x32xbf16>
    %80 = vector.shape_cast %79 : vector<1x12x32xbf16> to vector<12x32xbf16>
    %81 = arith.truncf %76 : vector<16x12xf32> to vector<16x12xbf16>
    %cst_57 = arith.constant dense<0.000000e+00> : vector<16x32xf32>
    %82 = tpu.matmul %81, %80, %cst_57 {dimension_numbers = #tpu.dot_dimension_numbers<[1], [0], [0], [1], [0, 0, 1, 1], [], []>} : vector<16x12xbf16>, vector<12x32xbf16>, vector<16x32xf32> -> vector<16x32xf32>
    %83 = vector.shape_cast %82 : vector<16x32xf32> to vector<2x8x32xf32>
    %84 = arith.extf %78 : vector<8x32xbf16> to vector<8x32xf32>
    %85 = vector.shape_cast %84 : vector<8x32xf32> to vector<1x8x32xf32>
    %86 = vector.broadcast %85 : vector<1x8x32xf32> to vector<2x8x32xf32>
    %87 = arith.addf %83, %86 : vector<2x8x32xf32>
    %88 = vector.shape_cast %87 : vector<2x8x32xf32> to vector<16x32xf32>
    %cst_58 = arith.constant 0.000000e+00 : f32
    %89 = vector.broadcast %cst_58 : f32 to vector<16x32xf32>
    %90 = arith.cmpf oge, %88, %89 : vector<16x32xf32>
    %cst_59 = arith.constant 2.500000e-01 : f32
    %91 = vector.broadcast %cst_59 : f32 to vector<16x32xf32>
    %92 = arith.mulf %91, %88 : vector<16x32xf32>
    %93 = arith.select %90, %88, %92 : vector<16x32xi1>, vector<16x32xf32>
    %c0_60 = arith.constant 0 : index
    %c0_61 = arith.constant 0 : index
    %94 = vector.load %arg6[%c0_60, %c0_61] : memref<32x32xbf16, #tpu.memory_space<vmem>>, vector<32x32xbf16>
    %95 = arith.truncf %93 : vector<16x32xf32> to vector<16x32xbf16>
    %cst_62 = arith.constant dense<0.000000e+00> : vector<16x32xf32>
    %96 = tpu.matmul %95, %94, %cst_62 {dimension_numbers = #tpu.dot_dimension_numbers<[1], [0], [0], [1], [0, 0, 1, 1], [], []>} : vector<16x32xbf16>, vector<32x32xbf16>, vector<16x32xf32> -> vector<16x32xf32>
    %c0_63 = arith.constant 0 : index
    %c0_64 = arith.constant 0 : index
    %97 = vector.load %arg7[%c0_63, %c0_64] : memref<1x32xf32, #tpu.memory_space<vmem>>, vector<1x32xf32>
    %98 = vector.broadcast %97 : vector<1x32xf32> to vector<16x32xf32>
    %99 = arith.addf %96, %98 : vector<16x32xf32>
    %cst_65 = arith.constant 0.000000e+00 : f32
    %100 = vector.broadcast %cst_65 : f32 to vector<16x32xf32>
    %101 = arith.cmpf oge, %99, %100 : vector<16x32xf32>
    %cst_66 = arith.constant 2.500000e-01 : f32
    %102 = vector.broadcast %cst_66 : f32 to vector<16x32xf32>
    %103 = arith.mulf %102, %99 : vector<16x32xf32>
    %104 = arith.select %101, %99, %103 : vector<16x32xi1>, vector<16x32xf32>
    %105 = arith.addf %93, %104 : vector<16x32xf32>
    %c0_67 = arith.constant 0 : index
    %c0_68 = arith.constant 0 : index
    %106 = vector.load %arg8[%c0_67, %c0_68] : memref<32x4xbf16, #tpu.memory_space<vmem>>, vector<32x4xbf16>
    %107 = arith.truncf %105 : vector<16x32xf32> to vector<16x32xbf16>
    %cst_69 = arith.constant dense<0.000000e+00> : vector<16x4xf32>
    %108 = tpu.matmul %107, %106, %cst_69 {dimension_numbers = #tpu.dot_dimension_numbers<[1], [0], [0], [1], [0, 0, 1, 1], [], []>} : vector<16x32xbf16>, vector<32x4xbf16>, vector<16x4xf32> -> vector<16x4xf32>
    %c0_70 = arith.constant 0 : index
    %c0_71 = arith.constant 0 : index
    %109 = vector.load %arg9[%c0_70, %c0_71] : memref<1x4xf32, #tpu.memory_space<vmem>>, vector<1x4xf32>
    %110 = vector.broadcast %109 : vector<1x4xf32> to vector<16x4xf32>
    %111 = arith.addf %108, %110 : vector<16x4xf32>
    %112 = vector.extract_strided_slice %111 {offsets = [0, 0], sizes = [8, 4], strides = [1, 1]} : vector<16x4xf32> to vector<8x4xf32>
    %c0_72 = arith.constant 0 : index
    %c4 = arith.constant 4 : index
    %113 = vector.load %arg16[%c0_72, %c4] : memref<8x24xf32, #tpu.memory_space<vmem>>, vector<8x4xf32>
    tpu.vector_store %arg16[%c0_72, %c4], %112 {strides = array<i32>} : memref<8x24xf32, #tpu.memory_space<vmem>>, vector<8x4xf32>,
    %114 = vector.extract_strided_slice %111 {offsets = [8, 0], sizes = [8, 4], strides = [1, 1]} : vector<16x4xf32> to vector<8x4xf32>
    %c0_73 = arith.constant 0 : index
    %c4_74 = arith.constant 4 : index
    %115 = vector.load %arg17[%c0_73, %c4_74] : memref<8x24xf32, #tpu.memory_space<vmem>>, vector<8x4xf32>
    tpu.vector_store %arg17[%c0_73, %c4_74], %114 {strides = array<i32>} : memref<8x24xf32, #tpu.memory_space<vmem>>, vector<8x4xf32>,
    %c0_75 = arith.constant 0 : index
    %c4_76 = arith.constant 4 : index
    %116 = vector.load %arg18[%c0_75, %c4_76] : memref<16x12xf32, #tpu.memory_space<vmem>>, vector<16x4xf32>
    tpu.vector_store %arg18[%c0_75, %c4_76], %111 {strides = array<i32>} : memref<16x12xf32, #tpu.memory_space<vmem>>, vector<16x4xf32>,
    %c0_77 = arith.constant 0 : index
    %c0_78 = arith.constant 0 : index
    %117 = vector.load %arg18[%c0_77, %c0_78] : memref<16x12xf32, #tpu.memory_space<vmem>>, vector<16x12xf32>
    %c2 = arith.constant 2 : index
    %c0_79 = arith.constant 0 : index
    %c0_80 = arith.constant 0 : index
    %118 = vector.load %arg2[%c2, %c0_79, %c0_80] : memref<6x8x32xbf16, #tpu.memory_space<vmem>>, vector<1x8x32xbf16>
    %119 = vector.shape_cast %118 : vector<1x8x32xbf16> to vector<8x32xbf16>
    %c2_81 = arith.constant 2 : index
    %c0_82 = arith.constant 0 : index
    %c0_83 = arith.constant 0 : index
    %120 = vector.load %arg5[%c2_81, %c0_82, %c0_83] : memref<3x12x32xbf16, #tpu.memory_space<vmem>>, vector<1x12x32xbf16>
    %121 = vector.shape_cast %120 : vector<1x12x32xbf16> to vector<12x32xbf16>
    %122 = arith.truncf %117 : vector<16x12xf32> to vector<16x12xbf16>
    %cst_84 = arith.constant dense<0.000000e+00> : vector<16x32xf32>
    %123 = tpu.matmul %122, %121, %cst_84 {dimension_numbers = #tpu.dot_dimension_numbers<[1], [0], [0], [1], [0, 0, 1, 1], [], []>} : vector<16x12xbf16>, vector<12x32xbf16>, vector<16x32xf32> -> vector<16x32xf32>
    %124 = vector.shape_cast %123 : vector<16x32xf32> to vector<2x8x32xf32>
    %125 = arith.extf %119 : vector<8x32xbf16> to vector<8x32xf32>
    %126 = vector.shape_cast %125 : vector<8x32xf32> to vector<1x8x32xf32>
    %127 = vector.broadcast %126 : vector<1x8x32xf32> to vector<2x8x32xf32>
    %128 = arith.addf %124, %127 : vector<2x8x32xf32>
    %129 = vector.shape_cast %128 : vector<2x8x32xf32> to vector<16x32xf32>
    %cst_85 = arith.constant 0.000000e+00 : f32
    %130 = vector.broadcast %cst_85 : f32 to vector<16x32xf32>
    %131 = arith.cmpf oge, %129, %130 : vector<16x32xf32>
    %cst_86 = arith.constant 2.500000e-01 : f32
    %132 = vector.broadcast %cst_86 : f32 to vector<16x32xf32>
    %133 = arith.mulf %132, %129 : vector<16x32xf32>
    %134 = arith.select %131, %129, %133 : vector<16x32xi1>, vector<16x32xf32>
    %c0_87 = arith.constant 0 : index
    %c0_88 = arith.constant 0 : index
    %135 = vector.load %arg6[%c0_87, %c0_88] : memref<32x32xbf16, #tpu.memory_space<vmem>>, vector<32x32xbf16>
    %136 = arith.truncf %134 : vector<16x32xf32> to vector<16x32xbf16>
    %cst_89 = arith.constant dense<0.000000e+00> : vector<16x32xf32>
    %137 = tpu.matmul %136, %135, %cst_89 {dimension_numbers = #tpu.dot_dimension_numbers<[1], [0], [0], [1], [0, 0, 1, 1], [], []>} : vector<16x32xbf16>, vector<32x32xbf16>, vector<16x32xf32> -> vector<16x32xf32>
    %c0_90 = arith.constant 0 : index
    %c0_91 = arith.constant 0 : index
    %138 = vector.load %arg7[%c0_90, %c0_91] : memref<1x32xf32, #tpu.memory_space<vmem>>, vector<1x32xf32>
    %139 = vector.broadcast %138 : vector<1x32xf32> to vector<16x32xf32>
    %140 = arith.addf %137, %139 : vector<16x32xf32>
    %cst_92 = arith.constant 0.000000e+00 : f32
    %141 = vector.broadcast %cst_92 : f32 to vector<16x32xf32>
    %142 = arith.cmpf oge, %140, %141 : vector<16x32xf32>
    %cst_93 = arith.constant 2.500000e-01 : f32
    %143 = vector.broadcast %cst_93 : f32 to vector<16x32xf32>
    %144 = arith.mulf %143, %140 : vector<16x32xf32>
    %145 = arith.select %142, %140, %144 : vector<16x32xi1>, vector<16x32xf32>
    %146 = arith.addf %134, %145 : vector<16x32xf32>
    %c0_94 = arith.constant 0 : index
    %c0_95 = arith.constant 0 : index
    %147 = vector.load %arg8[%c0_94, %c0_95] : memref<32x4xbf16, #tpu.memory_space<vmem>>, vector<32x4xbf16>
    %148 = arith.truncf %146 : vector<16x32xf32> to vector<16x32xbf16>
    %cst_96 = arith.constant dense<0.000000e+00> : vector<16x4xf32>
    %149 = tpu.matmul %148, %147, %cst_96 {dimension_numbers = #tpu.dot_dimension_numbers<[1], [0], [0], [1], [0, 0, 1, 1], [], []>} : vector<16x32xbf16>, vector<32x4xbf16>, vector<16x4xf32> -> vector<16x4xf32>
    %c0_97 = arith.constant 0 : index
    %c0_98 = arith.constant 0 : index
    %150 = vector.load %arg9[%c0_97, %c0_98] : memref<1x4xf32, #tpu.memory_space<vmem>>, vector<1x4xf32>
    %151 = vector.broadcast %150 : vector<1x4xf32> to vector<16x4xf32>
    %152 = arith.addf %149, %151 : vector<16x4xf32>
    %153 = vector.extract_strided_slice %152 {offsets = [0, 0], sizes = [8, 4], strides = [1, 1]} : vector<16x4xf32> to vector<8x4xf32>
    %c0_99 = arith.constant 0 : index
    %c8_100 = arith.constant 8 : index
    %154 = vector.load %arg16[%c0_99, %c8_100] : memref<8x24xf32, #tpu.memory_space<vmem>>, vector<8x4xf32>
    tpu.vector_store %arg16[%c0_99, %c8_100], %153 {strides = array<i32>} : memref<8x24xf32, #tpu.memory_space<vmem>>, vector<8x4xf32>,
    %155 = vector.extract_strided_slice %152 {offsets = [8, 0], sizes = [8, 4], strides = [1, 1]} : vector<16x4xf32> to vector<8x4xf32>
    %c0_101 = arith.constant 0 : index
    %c8_102 = arith.constant 8 : index
    %156 = vector.load %arg17[%c0_101, %c8_102] : memref<8x24xf32, #tpu.memory_space<vmem>>, vector<8x4xf32>
    tpu.vector_store %arg17[%c0_101, %c8_102], %155 {strides = array<i32>} : memref<8x24xf32, #tpu.memory_space<vmem>>, vector<8x4xf32>,
    %c0_103 = arith.constant 0 : index
    %c8_104 = arith.constant 8 : index
    %157 = vector.load %arg18[%c0_103, %c8_104] : memref<16x12xf32, #tpu.memory_space<vmem>>, vector<16x4xf32>
    tpu.vector_store %arg18[%c0_103, %c8_104], %152 {strides = array<i32>} : memref<16x12xf32, #tpu.memory_space<vmem>>, vector<16x4xf32>,
    %c0_105 = arith.constant 0 : index
    %c0_106 = arith.constant 0 : index
    %158 = vector.load %arg18[%c0_105, %c0_106] : memref<16x12xf32, #tpu.memory_space<vmem>>, vector<16x12xf32>
    %c3 = arith.constant 3 : index
    %c0_107 = arith.constant 0 : index
    %c0_108 = arith.constant 0 : index
    %159 = vector.load %arg2[%c3, %c0_107, %c0_108] : memref<6x8x32xbf16, #tpu.memory_space<vmem>>, vector<1x8x32xbf16>
    %160 = vector.shape_cast %159 : vector<1x8x32xbf16> to vector<8x32xbf16>
    %c0_109 = arith.constant 0 : index
    %c0_110 = arith.constant 0 : index
    %c0_111 = arith.constant 0 : index
    %161 = vector.load %arg5[%c0_109, %c0_110, %c0_111] : memref<3x12x32xbf16, #tpu.memory_space<vmem>>, vector<1x12x32xbf16>
    %162 = vector.shape_cast %161 : vector<1x12x32xbf16> to vector<12x32xbf16>
    %163 = arith.truncf %158 : vector<16x12xf32> to vector<16x12xbf16>
    %cst_112 = arith.constant dense<0.000000e+00> : vector<16x32xf32>
    %164 = tpu.matmul %163, %162, %cst_112 {dimension_numbers = #tpu.dot_dimension_numbers<[1], [0], [0], [1], [0, 0, 1, 1], [], []>} : vector<16x12xbf16>, vector<12x32xbf16>, vector<16x32xf32> -> vector<16x32xf32>
    %165 = vector.shape_cast %164 : vector<16x32xf32> to vector<2x8x32xf32>
    %166 = arith.extf %160 : vector<8x32xbf16> to vector<8x32xf32>
    %167 = vector.shape_cast %166 : vector<8x32xf32> to vector<1x8x32xf32>
    %168 = vector.broadcast %167 : vector<1x8x32xf32> to vector<2x8x32xf32>
    %169 = arith.addf %165, %168 : vector<2x8x32xf32>
    %170 = vector.shape_cast %169 : vector<2x8x32xf32> to vector<16x32xf32>
    %cst_113 = arith.constant 0.000000e+00 : f32
    %171 = vector.broadcast %cst_113 : f32 to vector<16x32xf32>
    %172 = arith.cmpf oge, %170, %171 : vector<16x32xf32>
    %cst_114 = arith.constant 2.500000e-01 : f32
    %173 = vector.broadcast %cst_114 : f32 to vector<16x32xf32>
    %174 = arith.mulf %173, %170 : vector<16x32xf32>
    %175 = arith.select %172, %170, %174 : vector<16x32xi1>, vector<16x32xf32>
    %c0_115 = arith.constant 0 : index
    %c0_116 = arith.constant 0 : index
    %176 = vector.load %arg6[%c0_115, %c0_116] : memref<32x32xbf16, #tpu.memory_space<vmem>>, vector<32x32xbf16>
    %177 = arith.truncf %175 : vector<16x32xf32> to vector<16x32xbf16>
    %cst_117 = arith.constant dense<0.000000e+00> : vector<16x32xf32>
    %178 = tpu.matmul %177, %176, %cst_117 {dimension_numbers = #tpu.dot_dimension_numbers<[1], [0], [0], [1], [0, 0, 1, 1], [], []>} : vector<16x32xbf16>, vector<32x32xbf16>, vector<16x32xf32> -> vector<16x32xf32>
    %c0_118 = arith.constant 0 : index
    %c0_119 = arith.constant 0 : index
    %179 = vector.load %arg7[%c0_118, %c0_119] : memref<1x32xf32, #tpu.memory_space<vmem>>, vector<1x32xf32>
    %180 = vector.broadcast %179 : vector<1x32xf32> to vector<16x32xf32>
    %181 = arith.addf %178, %180 : vector<16x32xf32>
    %cst_120 = arith.constant 0.000000e+00 : f32
    %182 = vector.broadcast %cst_120 : f32 to vector<16x32xf32>
    %183 = arith.cmpf oge, %181, %182 : vector<16x32xf32>
    %cst_121 = arith.constant 2.500000e-01 : f32
    %184 = vector.broadcast %cst_121 : f32 to vector<16x32xf32>
    %185 = arith.mulf %184, %181 : vector<16x32xf32>
    %186 = arith.select %183, %181, %185 : vector<16x32xi1>, vector<16x32xf32>
    %187 = arith.addf %175, %186 : vector<16x32xf32>
    %c0_122 = arith.constant 0 : index
    %c0_123 = arith.constant 0 : index
    %188 = vector.load %arg8[%c0_122, %c0_123] : memref<32x4xbf16, #tpu.memory_space<vmem>>, vector<32x4xbf16>
    %189 = arith.truncf %187 : vector<16x32xf32> to vector<16x32xbf16>
    %cst_124 = arith.constant dense<0.000000e+00> : vector<16x4xf32>
    %190 = tpu.matmul %189, %188, %cst_124 {dimension_numbers = #tpu.dot_dimension_numbers<[1], [0], [0], [1], [0, 0, 1, 1], [], []>} : vector<16x32xbf16>, vector<32x4xbf16>, vector<16x4xf32> -> vector<16x4xf32>
    %c0_125 = arith.constant 0 : index
    %c0_126 = arith.constant 0 : index
    %191 = vector.load %arg9[%c0_125, %c0_126] : memref<1x4xf32, #tpu.memory_space<vmem>>, vector<1x4xf32>
    %192 = vector.broadcast %191 : vector<1x4xf32> to vector<16x4xf32>
    %193 = arith.addf %190, %192 : vector<16x4xf32>
    %194 = vector.extract_strided_slice %193 {offsets = [0, 0], sizes = [8, 4], strides = [1, 1]} : vector<16x4xf32> to vector<8x4xf32>
    %c0_127 = arith.constant 0 : index
    %c12 = arith.constant 12 : index
    %195 = vector.load %arg16[%c0_127, %c12] : memref<8x24xf32, #tpu.memory_space<vmem>>, vector<8x4xf32>
    tpu.vector_store %arg16[%c0_127, %c12], %194 {strides = array<i32>} : memref<8x24xf32, #tpu.memory_space<vmem>>, vector<8x4xf32>,
    %196 = vector.extract_strided_slice %193 {offsets = [8, 0], sizes = [8, 4], strides = [1, 1]} : vector<16x4xf32> to vector<8x4xf32>
    %c0_128 = arith.constant 0 : index
    %c12_129 = arith.constant 12 : index
    %197 = vector.load %arg17[%c0_128, %c12_129] : memref<8x24xf32, #tpu.memory_space<vmem>>, vector<8x4xf32>
    tpu.vector_store %arg17[%c0_128, %c12_129], %196 {strides = array<i32>} : memref<8x24xf32, #tpu.memory_space<vmem>>, vector<8x4xf32>,
    %c0_130 = arith.constant 0 : index
    %c0_131 = arith.constant 0 : index
    %198 = vector.load %arg18[%c0_130, %c0_131] : memref<16x12xf32, #tpu.memory_space<vmem>>, vector<16x4xf32>
    tpu.vector_store %arg18[%c0_130, %c0_131], %193 {strides = array<i32>} : memref<16x12xf32, #tpu.memory_space<vmem>>, vector<16x4xf32>,
    %c8_132 = arith.constant 8 : index
    %c0_133 = arith.constant 0 : index
    %199 = vector.load %arg18[%c8_132, %c0_133] : memref<16x12xf32, #tpu.memory_space<vmem>>, vector<8x12xf32>
    %c0_134 = arith.constant 0 : index
    %c0_135 = arith.constant 0 : index
    %200 = vector.load %arg10[%c0_134, %c0_135] : memref<12x96xbf16, #tpu.memory_space<vmem>>, vector<12x96xbf16>
    %201 = arith.truncf %199 : vector<8x12xf32> to vector<8x12xbf16>
    %cst_136 = arith.constant dense<0.000000e+00> : vector<8x96xf32>
    %202 = tpu.matmul %201, %200, %cst_136 {dimension_numbers = #tpu.dot_dimension_numbers<[1], [0], [0], [1], [0, 0, 1, 1], [], []>} : vector<8x12xbf16>, vector<12x96xbf16>, vector<8x96xf32> -> vector<8x96xf32>
    %c0_137 = arith.constant 0 : index
    %c0_138 = arith.constant 0 : index
    %203 = vector.load %arg11[%c0_137, %c0_138] : memref<1x96xf32, #tpu.memory_space<vmem>>, vector<1x96xf32>
    %204 = vector.broadcast %203 : vector<1x96xf32> to vector<8x96xf32>
    %205 = arith.addf %202, %204 : vector<8x96xf32>
    %cst_139 = arith.constant 0.000000e+00 : f32
    %206 = vector.broadcast %cst_139 : f32 to vector<8x96xf32>
    %207 = arith.cmpf oge, %205, %206 : vector<8x96xf32>
    %cst_140 = arith.constant 2.500000e-01 : f32
    %208 = vector.broadcast %cst_140 : f32 to vector<8x96xf32>
    %209 = arith.mulf %208, %205 : vector<8x96xf32>
    %210 = arith.select %207, %205, %209 : vector<8x96xi1>, vector<8x96xf32>
    %c0_141 = arith.constant 0 : index
    %c0_142 = arith.constant 0 : index
    %211 = vector.load %arg12[%c0_141, %c0_142] : memref<96x96xbf16, #tpu.memory_space<vmem>>, vector<96x96xbf16>
    %212 = arith.truncf %210 : vector<8x96xf32> to vector<8x96xbf16>
    %cst_143 = arith.constant dense<0.000000e+00> : vector<8x96xf32>
    %213 = tpu.matmul %212, %211, %cst_143 {dimension_numbers = #tpu.dot_dimension_numbers<[1], [0], [0], [1], [0, 0, 1, 1], [], []>} : vector<8x96xbf16>, vector<96x96xbf16>, vector<8x96xf32> -> vector<8x96xf32>
    %c0_144 = arith.constant 0 : index
    %c0_145 = arith.constant 0 : index
    %214 = vector.load %arg13[%c0_144, %c0_145] : memref<1x96xf32, #tpu.memory_space<vmem>>, vector<1x96xf32>
    %215 = vector.broadcast %214 : vector<1x96xf32> to vector<8x96xf32>
    %216 = arith.addf %213, %215 : vector<8x96xf32>
    %cst_146 = arith.constant 0.000000e+00 : f32
    %217 = vector.broadcast %cst_146 : f32 to vector<8x96xf32>
    %218 = arith.cmpf oge, %216, %217 : vector<8x96xf32>
    %cst_147 = arith.constant 2.500000e-01 : f32
    %219 = vector.broadcast %cst_147 : f32 to vector<8x96xf32>
    %220 = arith.mulf %219, %216 : vector<8x96xf32>
    %221 = arith.select %218, %216, %220 : vector<8x96xi1>, vector<8x96xf32>
    %222 = arith.addf %210, %221 : vector<8x96xf32>
    %c0_148 = arith.constant 0 : index
    %c0_149 = arith.constant 0 : index
    %223 = vector.load %arg14[%c0_148, %c0_149] : memref<96x12xbf16, #tpu.memory_space<vmem>>, vector<96x12xbf16>
    %224 = arith.truncf %222 : vector<8x96xf32> to vector<8x96xbf16>
    %cst_150 = arith.constant dense<0.000000e+00> : vector<8x12xf32>
    %225 = tpu.matmul %224, %223, %cst_150 {dimension_numbers = #tpu.dot_dimension_numbers<[1], [0], [0], [1], [0, 0, 1, 1], [], []>} : vector<8x96xbf16>, vector<96x12xbf16>, vector<8x12xf32> -> vector<8x12xf32>
    %c0_151 = arith.constant 0 : index
    %c0_152 = arith.constant 0 : index
    %226 = vector.load %arg15[%c0_151, %c0_152] : memref<1x12xf32, #tpu.memory_space<vmem>>, vector<1x12xf32>
    %227 = vector.broadcast %226 : vector<1x12xf32> to vector<8x12xf32>
    %228 = arith.addf %225, %227 : vector<8x12xf32>
    %229 = arith.addf %199, %228 : vector<8x12xf32>
    %c8_153 = arith.constant 8 : index
    %c0_154 = arith.constant 0 : index
    %230 = vector.load %arg18[%c8_153, %c0_154] : memref<16x12xf32, #tpu.memory_space<vmem>>, vector<8x12xf32>
    tpu.vector_store %arg18[%c8_153, %c0_154], %229 {strides = array<i32>} : memref<16x12xf32, #tpu.memory_space<vmem>>, vector<8x12xf32>,
    %c0_155 = arith.constant 0 : index
    %c0_156 = arith.constant 0 : index
    %231 = vector.load %arg18[%c0_155, %c0_156] : memref<16x12xf32, #tpu.memory_space<vmem>>, vector<16x12xf32>
    %c4_157 = arith.constant 4 : index
    %c0_158 = arith.constant 0 : index
    %c0_159 = arith.constant 0 : index
    %232 = vector.load %arg2[%c4_157, %c0_158, %c0_159] : memref<6x8x32xbf16, #tpu.memory_space<vmem>>, vector<1x8x32xbf16>
    %233 = vector.shape_cast %232 : vector<1x8x32xbf16> to vector<8x32xbf16>
    %c1_160 = arith.constant 1 : index
    %c0_161 = arith.constant 0 : index
    %c0_162 = arith.constant 0 : index
    %234 = vector.load %arg5[%c1_160, %c0_161, %c0_162] : memref<3x12x32xbf16, #tpu.memory_space<vmem>>, vector<1x12x32xbf16>
    %235 = vector.shape_cast %234 : vector<1x12x32xbf16> to vector<12x32xbf16>
    %236 = arith.truncf %231 : vector<16x12xf32> to vector<16x12xbf16>
    %cst_163 = arith.constant dense<0.000000e+00> : vector<16x32xf32>
    %237 = tpu.matmul %236, %235, %cst_163 {dimension_numbers = #tpu.dot_dimension_numbers<[1], [0], [0], [1], [0, 0, 1, 1], [], []>} : vector<16x12xbf16>, vector<12x32xbf16>, vector<16x32xf32> -> vector<16x32xf32>
    %238 = vector.shape_cast %237 : vector<16x32xf32> to vector<2x8x32xf32>
    %239 = arith.extf %233 : vector<8x32xbf16> to vector<8x32xf32>
    %240 = vector.shape_cast %239 : vector<8x32xf32> to vector<1x8x32xf32>
    %241 = vector.broadcast %240 : vector<1x8x32xf32> to vector<2x8x32xf32>
    %242 = arith.addf %238, %241 : vector<2x8x32xf32>
    %243 = vector.shape_cast %242 : vector<2x8x32xf32> to vector<16x32xf32>
    %cst_164 = arith.constant 0.000000e+00 : f32
    %244 = vector.broadcast %cst_164 : f32 to vector<16x32xf32>
    %245 = arith.cmpf oge, %243, %244 : vector<16x32xf32>
    %cst_165 = arith.constant 2.500000e-01 : f32
    %246 = vector.broadcast %cst_165 : f32 to vector<16x32xf32>
    %247 = arith.mulf %246, %243 : vector<16x32xf32>
    %248 = arith.select %245, %243, %247 : vector<16x32xi1>, vector<16x32xf32>
    %c0_166 = arith.constant 0 : index
    %c0_167 = arith.constant 0 : index
    %249 = vector.load %arg6[%c0_166, %c0_167] : memref<32x32xbf16, #tpu.memory_space<vmem>>, vector<32x32xbf16>
    %250 = arith.truncf %248 : vector<16x32xf32> to vector<16x32xbf16>
    %cst_168 = arith.constant dense<0.000000e+00> : vector<16x32xf32>
    %251 = tpu.matmul %250, %249, %cst_168 {dimension_numbers = #tpu.dot_dimension_numbers<[1], [0], [0], [1], [0, 0, 1, 1], [], []>} : vector<16x32xbf16>, vector<32x32xbf16>, vector<16x32xf32> -> vector<16x32xf32>
    %c0_169 = arith.constant 0 : index
    %c0_170 = arith.constant 0 : index
    %252 = vector.load %arg7[%c0_169, %c0_170] : memref<1x32xf32, #tpu.memory_space<vmem>>, vector<1x32xf32>
    %253 = vector.broadcast %252 : vector<1x32xf32> to vector<16x32xf32>
    %254 = arith.addf %251, %253 : vector<16x32xf32>
    %cst_171 = arith.constant 0.000000e+00 : f32
    %255 = vector.broadcast %cst_171 : f32 to vector<16x32xf32>
    %256 = arith.cmpf oge, %254, %255 : vector<16x32xf32>
    %cst_172 = arith.constant 2.500000e-01 : f32
    %257 = vector.broadcast %cst_172 : f32 to vector<16x32xf32>
    %258 = arith.mulf %257, %254 : vector<16x32xf32>
    %259 = arith.select %256, %254, %258 : vector<16x32xi1>, vector<16x32xf32>
    %260 = arith.addf %248, %259 : vector<16x32xf32>
    %c0_173 = arith.constant 0 : index
    %c0_174 = arith.constant 0 : index
    %261 = vector.load %arg8[%c0_173, %c0_174] : memref<32x4xbf16, #tpu.memory_space<vmem>>, vector<32x4xbf16>
    %262 = arith.truncf %260 : vector<16x32xf32> to vector<16x32xbf16>
    %cst_175 = arith.constant dense<0.000000e+00> : vector<16x4xf32>
    %263 = tpu.matmul %262, %261, %cst_175 {dimension_numbers = #tpu.dot_dimension_numbers<[1], [0], [0], [1], [0, 0, 1, 1], [], []>} : vector<16x32xbf16>, vector<32x4xbf16>, vector<16x4xf32> -> vector<16x4xf32>
    %c0_176 = arith.constant 0 : index
    %c0_177 = arith.constant 0 : index
    %264 = vector.load %arg9[%c0_176, %c0_177] : memref<1x4xf32, #tpu.memory_space<vmem>>, vector<1x4xf32>
    %265 = vector.broadcast %264 : vector<1x4xf32> to vector<16x4xf32>
    %266 = arith.addf %263, %265 : vector<16x4xf32>
    %267 = vector.extract_strided_slice %266 {offsets = [0, 0], sizes = [8, 4], strides = [1, 1]} : vector<16x4xf32> to vector<8x4xf32>
    %c0_178 = arith.constant 0 : index
    %c16 = arith.constant 16 : index
    %268 = vector.load %arg16[%c0_178, %c16] : memref<8x24xf32, #tpu.memory_space<vmem>>, vector<8x4xf32>
    tpu.vector_store %arg16[%c0_178, %c16], %267 {strides = array<i32>} : memref<8x24xf32, #tpu.memory_space<vmem>>, vector<8x4xf32>,
    %269 = vector.extract_strided_slice %266 {offsets = [8, 0], sizes = [8, 4], strides = [1, 1]} : vector<16x4xf32> to vector<8x4xf32>
    %c0_179 = arith.constant 0 : index
    %c16_180 = arith.constant 16 : index
    %270 = vector.load %arg17[%c0_179, %c16_180] : memref<8x24xf32, #tpu.memory_space<vmem>>, vector<8x4xf32>
    tpu.vector_store %arg17[%c0_179, %c16_180], %269 {strides = array<i32>} : memref<8x24xf32, #tpu.memory_space<vmem>>, vector<8x4xf32>,
    %c0_181 = arith.constant 0 : index
    %c4_182 = arith.constant 4 : index
    %271 = vector.load %arg18[%c0_181, %c4_182] : memref<16x12xf32, #tpu.memory_space<vmem>>, vector<16x4xf32>
    tpu.vector_store %arg18[%c0_181, %c4_182], %266 {strides = array<i32>} : memref<16x12xf32, #tpu.memory_space<vmem>>, vector<16x4xf32>,
    %c0_183 = arith.constant 0 : index
    %c0_184 = arith.constant 0 : index
    %272 = vector.load %arg18[%c0_183, %c0_184] : memref<16x12xf32, #tpu.memory_space<vmem>>, vector<16x12xf32>
    %c5 = arith.constant 5 : index
    %c0_185 = arith.constant 0 : index
    %c0_186 = arith.constant 0 : index
    %273 = vector.load %arg2[%c5, %c0_185, %c0_186] : memref<6x8x32xbf16, #tpu.memory_space<vmem>>, vector<1x8x32xbf16>
    %274 = vector.shape_cast %273 : vector<1x8x32xbf16> to vector<8x32xbf16>
    %c2_187 = arith.constant 2 : index
    %c0_188 = arith.constant 0 : index
    %c0_189 = arith.constant 0 : index
    %275 = vector.load %arg5[%c2_187, %c0_188, %c0_189] : memref<3x12x32xbf16, #tpu.memory_space<vmem>>, vector<1x12x32xbf16>
    %276 = vector.shape_cast %275 : vector<1x12x32xbf16> to vector<12x32xbf16>
    %277 = arith.truncf %272 : vector<16x12xf32> to vector<16x12xbf16>
    %cst_190 = arith.constant dense<0.000000e+00> : vector<16x32xf32>
    %278 = tpu.matmul %277, %276, %cst_190 {dimension_numbers = #tpu.dot_dimension_numbers<[1], [0], [0], [1], [0, 0, 1, 1], [], []>} : vector<16x12xbf16>, vector<12x32xbf16>, vector<16x32xf32> -> vector<16x32xf32>
    %279 = vector.shape_cast %278 : vector<16x32xf32> to vector<2x8x32xf32>
    %280 = arith.extf %274 : vector<8x32xbf16> to vector<8x32xf32>
    %281 = vector.shape_cast %280 : vector<8x32xf32> to vector<1x8x32xf32>
    %282 = vector.broadcast %281 : vector<1x8x32xf32> to vector<2x8x32xf32>
    %283 = arith.addf %279, %282 : vector<2x8x32xf32>
    %284 = vector.shape_cast %283 : vector<2x8x32xf32> to vector<16x32xf32>
    %cst_191 = arith.constant 0.000000e+00 : f32
    %285 = vector.broadcast %cst_191 : f32 to vector<16x32xf32>
    %286 = arith.cmpf oge, %284, %285 : vector<16x32xf32>
    %cst_192 = arith.constant 2.500000e-01 : f32
    %287 = vector.broadcast %cst_192 : f32 to vector<16x32xf32>
    %288 = arith.mulf %287, %284 : vector<16x32xf32>
    %289 = arith.select %286, %284, %288 : vector<16x32xi1>, vector<16x32xf32>
    %c0_193 = arith.constant 0 : index
    %c0_194 = arith.constant 0 : index
    %290 = vector.load %arg6[%c0_193, %c0_194] : memref<32x32xbf16, #tpu.memory_space<vmem>>, vector<32x32xbf16>
    %291 = arith.truncf %289 : vector<16x32xf32> to vector<16x32xbf16>
    %cst_195 = arith.constant dense<0.000000e+00> : vector<16x32xf32>
    %292 = tpu.matmul %291, %290, %cst_195 {dimension_numbers = #tpu.dot_dimension_numbers<[1], [0], [0], [1], [0, 0, 1, 1], [], []>} : vector<16x32xbf16>, vector<32x32xbf16>, vector<16x32xf32> -> vector<16x32xf32>
    %c0_196 = arith.constant 0 : index
    %c0_197 = arith.constant 0 : index
    %293 = vector.load %arg7[%c0_196, %c0_197] : memref<1x32xf32, #tpu.memory_space<vmem>>, vector<1x32xf32>
    %294 = vector.broadcast %293 : vector<1x32xf32> to vector<16x32xf32>
    %295 = arith.addf %292, %294 : vector<16x32xf32>
    %cst_198 = arith.constant 0.000000e+00 : f32
    %296 = vector.broadcast %cst_198 : f32 to vector<16x32xf32>
    %297 = arith.cmpf oge, %295, %296 : vector<16x32xf32>
    %cst_199 = arith.constant 2.500000e-01 : f32
    %298 = vector.broadcast %cst_199 : f32 to vector<16x32xf32>
    %299 = arith.mulf %298, %295 : vector<16x32xf32>
    %300 = arith.select %297, %295, %299 : vector<16x32xi1>, vector<16x32xf32>
    %301 = arith.addf %289, %300 : vector<16x32xf32>
    %c0_200 = arith.constant 0 : index
    %c0_201 = arith.constant 0 : index
    %302 = vector.load %arg8[%c0_200, %c0_201] : memref<32x4xbf16, #tpu.memory_space<vmem>>, vector<32x4xbf16>
    %303 = arith.truncf %301 : vector<16x32xf32> to vector<16x32xbf16>
    %cst_202 = arith.constant dense<0.000000e+00> : vector<16x4xf32>
    %304 = tpu.matmul %303, %302, %cst_202 {dimension_numbers = #tpu.dot_dimension_numbers<[1], [0], [0], [1], [0, 0, 1, 1], [], []>} : vector<16x32xbf16>, vector<32x4xbf16>, vector<16x4xf32> -> vector<16x4xf32>
    %c0_203 = arith.constant 0 : index
    %c0_204 = arith.constant 0 : index
    %305 = vector.load %arg9[%c0_203, %c0_204] : memref<1x4xf32, #tpu.memory_space<vmem>>, vector<1x4xf32>
    %306 = vector.broadcast %305 : vector<1x4xf32> to vector<16x4xf32>
    %307 = arith.addf %304, %306 : vector<16x4xf32>
    %308 = vector.extract_strided_slice %307 {offsets = [0, 0], sizes = [8, 4], strides = [1, 1]} : vector<16x4xf32> to vector<8x4xf32>
    %c0_205 = arith.constant 0 : index
    %c20 = arith.constant 20 : index
    %309 = vector.load %arg16[%c0_205, %c20] : memref<8x24xf32, #tpu.memory_space<vmem>>, vector<8x4xf32>
    tpu.vector_store %arg16[%c0_205, %c20], %308 {strides = array<i32>} : memref<8x24xf32, #tpu.memory_space<vmem>>, vector<8x4xf32>,
    %310 = vector.extract_strided_slice %307 {offsets = [8, 0], sizes = [8, 4], strides = [1, 1]} : vector<16x4xf32> to vector<8x4xf32>
    %c0_206 = arith.constant 0 : index
    %c20_207 = arith.constant 20 : index
    %311 = vector.load %arg17[%c0_206, %c20_207] : memref<8x24xf32, #tpu.memory_space<vmem>>, vector<8x4xf32>
    tpu.vector_store %arg17[%c0_206, %c20_207], %310 {strides = array<i32>} : memref<8x24xf32, #tpu.memory_space<vmem>>, vector<8x4xf32>,
    %c0_208 = arith.constant 0 : index
    %c8_209 = arith.constant 8 : index
    %312 = vector.load %arg18[%c0_208, %c8_209] : memref<16x12xf32, #tpu.memory_space<vmem>>, vector<16x4xf32>
    tpu.vector_store %arg18[%c0_208, %c8_209], %307 {strides = array<i32>} : memref<16x12xf32, #tpu.memory_space<vmem>>, vector<16x4xf32>,
    return
  }
  func.func @transform_0(%arg0: i32, %arg1: i32) -> (i32, i32, i32) {
    %c0_i32 = arith.constant 0 : i32
    %c0_i32_0 = arith.constant 0 : i32
    return %arg1, %arg0, %c0_i32 : i32, i32, i32
  }
  func.func @transform_1(%arg0: i32, %arg1: i32) -> (i32, i32) {
    %c0_i32 = arith.constant 0 : i32
    %c0_i32_0 = arith.constant 0 : i32
    return %arg0, %c0_i32 : i32, i32
  }
  func.func @transform_2(%arg0: i32, %arg1: i32) -> (i32, i32) {
    %c0_i32 = arith.constant 0 : i32
    %c0_i32_0 = arith.constant 0 : i32
    return %arg0, %c0_i32 : i32, i32
  }
  func.func @transform_3(%arg0: i32, %arg1: i32) -> (i32, i32, i32) {
    %c0_i32 = arith.constant 0 : i32
    %c0_i32_0 = arith.constant 0 : i32
    %c0_i32_1 = arith.constant 0 : i32
    %c0_i32_2 = arith.constant 0 : i32
    return %c0_i32, %c0_i32_0, %c0_i32_1 : i32, i32, i32
  }
  func.func @transform_4(%arg0: i32, %arg1: i32) -> (i32, i32) {
    %c0_i32 = arith.constant 0 : i32
    %c0_i32_0 = arith.constant 0 : i32
    %c0_i32_1 = arith.constant 0 : i32
    return %c0_i32, %c0_i32_0 : i32, i32
  }
  func.func @transform_5(%arg0: i32, %arg1: i32) -> (i32, i32) {
    %c0_i32 = arith.constant 0 : i32
    %c0_i32_0 = arith.constant 0 : i32
    %c0_i32_1 = arith.constant 0 : i32
    return %c0_i32, %c0_i32_0 : i32, i32
  }
  func.func @transform_6(%arg0: i32, %arg1: i32) -> (i32, i32) {
    %c0_i32 = arith.constant 0 : i32
    %c0_i32_0 = arith.constant 0 : i32
    %c0_i32_1 = arith.constant 0 : i32
    return %c0_i32, %c0_i32_0 : i32, i32
  }
  func.func @transform_7(%arg0: i32, %arg1: i32) -> (i32, i32) {
    %c0_i32 = arith.constant 0 : i32
    %c0_i32_0 = arith.constant 0 : i32
    %c0_i32_1 = arith.constant 0 : i32
    return %c0_i32, %c0_i32_0 : i32, i32
  }
  func.func @transform_8(%arg0: i32, %arg1: i32) -> (i32, i32) {
    %c0_i32 = arith.constant 0 : i32
    %c0_i32_0 = arith.constant 0 : i32
    %c0_i32_1 = arith.constant 0 : i32
    return %c0_i32, %c0_i32_0 : i32, i32
  }
  func.func @transform_9(%arg0: i32, %arg1: i32) -> (i32, i32) {
    %c0_i32 = arith.constant 0 : i32
    %c0_i32_0 = arith.constant 0 : i32
    %c0_i32_1 = arith.constant 0 : i32
    return %c0_i32, %c0_i32_0 : i32, i32
  }
  func.func @transform_10(%arg0: i32, %arg1: i32) -> (i32, i32) {
    %c0_i32 = arith.constant 0 : i32
    %c0_i32_0 = arith.constant 0 : i32
    %c0_i32_1 = arith.constant 0 : i32
    return %c0_i32, %c0_i32_0 : i32, i32
  }
  func.func @transform_11(%arg0: i32, %arg1: i32) -> (i32, i32) {
    %c0_i32 = arith.constant 0 : i32
    %c0_i32_0 = arith.constant 0 : i32
    %c0_i32_1 = arith.constant 0 : i32
    return %c0_i32, %c0_i32_0 : i32, i32
  }
  func.func @transform_12(%arg0: i32, %arg1: i32) -> (i32, i32) {
    %c0_i32 = arith.constant 0 : i32
    %c0_i32_0 = arith.constant 0 : i32
    %c0_i32_1 = arith.constant 0 : i32
    return %c0_i32, %c0_i32_0 : i32, i32
  }
  func.func @transform_13(%arg0: i32, %arg1: i32) -> (i32, i32) {
    %c0_i32 = arith.constant 0 : i32
    %c0_i32_0 = arith.constant 0 : i32
    %c0_i32_1 = arith.constant 0 : i32
    return %c0_i32, %c0_i32_0 : i32, i32
  }
  func.func @transform_14(%arg0: i32, %arg1: i32) -> (i32, i32) {
    %c0_i32 = arith.constant 0 : i32
    return %arg0, %arg1 : i32, i32
  }
  func.func @transform_15(%arg0: i32, %arg1: i32) -> (i32, i32) {
    %c0_i32 = arith.constant 0 : i32
    return %arg0, %arg1 : i32, i32
  }
}

</mosaic_0001>

<llo_original>
// kernel: tpu_custom_call.1
$region0: #{tpu_custom_call.1}
  #allocation0 [shape = 'u32[]', space=smem, size = 0x4, offset = 0x4, fixed_abs, tag = 'smem constant byte address 0x4 - core index']
  #allocation1 [shape = 'u32[144,128]{1,0:T(1,128)}', space=vmem, size = 0x12000, scoped, tag = 'internal scratch']
  #allocation2 [shape = 'f32[16,12]{1,0:T(8,128)}', space=vmem, size = 0x2000, scoped, tag = 'scratch operand']
  %s0 = inlined_call_operand.vmem [shape: bf16[6,8,32], index: 0, kind: input, shape index: {}]
  %s1 = inlined_call_operand.hbm [shape: f32[8,12], index: 1, kind: input, shape index: {}]
  %s2 = inlined_call_operand.hbm [shape: f32[8,12], index: 2, kind: input, shape index: {}]
  %s3 = inlined_call_operand.vmem [shape: bf16[3,12,32], index: 3, kind: input, shape index: {}]
  %s4 = inlined_call_operand.hbm [shape: bf16[32,32], index: 4, kind: input, shape index: {}]
  %s5 = inlined_call_operand.hbm [shape: f32[1,32], index: 5, kind: input, shape index: {}]
  %s6 = inlined_call_operand.vmem [shape: bf16[32,4], index: 6, kind: input, shape index: {}]
  %s7 = inlined_call_operand.hbm [shape: f32[1,4], index: 7, kind: input, shape index: {}]
  %s8 = inlined_call_operand.hbm [shape: bf16[12,96], index: 8, kind: input, shape index: {}]
  %s9 = inlined_call_operand.vmem [shape: f32[1,96], index: 9, kind: input, shape index: {}]
  %s10 = inlined_call_operand.vmem [shape: bf16[96,96], index: 10, kind: input, shape index: {}]
  %s11 = inlined_call_operand.vmem [shape: f32[1,96], index: 11, kind: input, shape index: {}]
  %s12 = inlined_call_operand.vmem [shape: bf16[96,12], index: 12, kind: input, shape index: {}]
  %s13 = inlined_call_operand.vmem [shape: f32[1,12], index: 13, kind: input, shape index: {}]
  %s14 = inlined_call_operand.hbm [shape: f32[8,24], index: 14, kind: output, shape index: {0}]
  %s15 = inlined_call_operand.hbm [shape: f32[8,24], index: 15, kind: output, shape index: {1}]
  %16 = xla_tuple %s14, %s15
  %s17 = sld [smem:[#allocation0]]
  $region102: #{tpu_custom_call.1} parent=0
    _
  %s19 = ssub.s32 1, %s17
  %s20 = scalar_select 0, %s19, %s17
  $region1: #{tpu_custom_call.1} parent=0
    #allocation3 [shape = 'u8[4096]{0}', space=vmem, size = 0x1000, scoped, tag = 'input window, operand 1, single buffered']
    #allocation4 [shape = 's32[1]{0}', space=sflag, size = 0x4, scoped, tag = 'scoped memory for tpu_custom_call.1']
    #allocation5 [shape = 's32[1]{0}', space=sflag, size = 0x4, scoped, tag = 'scoped memory for tpu_custom_call.1']
    #allocation6 [shape = 'u8[4096]{0}', space=vmem, size = 0x1000, scoped, tag = 'input window, operand 2, single buffered']
    #allocation7 [shape = 's32[1]{0}', space=sflag, size = 0x4, scoped, tag = 'scoped memory for tpu_custom_call.1']
    #allocation8 [shape = 'u8[8192]{0}', space=vmem, size = 0x2000, scoped, tag = 'input window, operand 4, single buffered']
    #allocation9 [shape = 'u8[512]{0}', space=vmem, size = 0x400, scoped, tag = 'input window, operand 5, single buffered']
    #allocation10 [shape = 's32[1]{0}', space=sflag, size = 0x4, scoped, tag = 'scoped memory for tpu_custom_call.1']
    #allocation11 [shape = 'u8[512]{0}', space=vmem, size = 0x400, scoped, tag = 'input window, operand 7, single buffered']
    #allocation12 [shape = 'u8[4096]{0}', space=vmem, size = 0x1000, scoped, tag = 'input window, operand 8, single buffered']
    #allocation13 [shape = 's32[1]{0}', space=sflag, size = 0x4, scoped, tag = 'scoped memory for tpu_custom_call.1']
    #allocation14 [shape = 'u8[4096]{0}', space=vmem, size = 0x1000, scoped, tag = 'output window, operand 0, single buffered']
    #allocation15 [shape = 'u8[4096]{0}', space=vmem, size = 0x1000, scoped, tag = 'output window, operand 1, single buffered']
    #allocation16 [shape = 's32[1]{0}', space=sflag, size = 0x4, scoped, tag = 'scoped memory for tpu_custom_call.1']
    %21 = vsyncpa [#allocation4], 0
    %22 = vsyncpa [#allocation7], 0
    %23 = vsyncpa [#allocation10], 0
    %24 = vsyncpa [#allocation13], 0
    %25 = vsyncpa [#allocation5], 0
    %26 = vsyncpa [#allocation16], 0
    // Predicated region
    $region2: #{tpu_custom_call.1} parent=1 // pred_check
      _
    $region3: #{tpu_custom_call.1} parent=1 // pred_check_branch
      %28 = sbr.rel (0) target = $region5
    $region4: #{tpu_custom_call.1} parent=1 // pred_region
      _
    $region5: #{tpu_custom_call.1} parent=1 // pred_fallthru
      _
    // Predicated region
    $region6: #{tpu_custom_call.1} parent=1 // pred_check
      _
    $region7: #{tpu_custom_call.1} parent=1 // pred_check_branch
      %30 = sbr.rel (0) target = $region9
    $region8: #{tpu_custom_call.1} parent=1 // pred_region
      %s32 = ssub.s32 128, 128
      %33 = vsyncadd [#allocation4], %s32
      %s35 = sshll.u32 [#allocation3], 4
      %s36 = int_to_ptr.vmem [resolvable:$true] %s35
      %38 = dma.hbm_to_vmem [thread:$0]  %s1, 128, %s36, [#allocation4]
    $region9: #{tpu_custom_call.1} parent=1 // pred_fallthru
      _
    // Predicated region
    $region10: #{tpu_custom_call.1} parent=1 // pred_check
      _
    $region11: #{tpu_custom_call.1} parent=1 // pred_check_branch
      %40 = sbr.rel (0) target = $region13
    $region12: #{tpu_custom_call.1} parent=1 // pred_region
      %s42 = ssub.s32 128, 128
      %43 = vsyncadd [#allocation7], %s42
      %s45 = sshll.u32 [#allocation6], 4
      %s46 = int_to_ptr.vmem [resolvable:$true] %s45
      %48 = dma.hbm_to_vmem [thread:$0]  %s2, 128, %s46, [#allocation7]
    $region13: #{tpu_custom_call.1} parent=1 // pred_fallthru
      _
    // Predicated region
    $region14: #{tpu_custom_call.1} parent=1 // pred_check
      _
    $region15: #{tpu_custom_call.1} parent=1 // pred_check_branch
      %50 = sbr.rel (0) target = $region17
    $region16: #{tpu_custom_call.1} parent=1 // pred_region
      _
    $region17: #{tpu_custom_call.1} parent=1 // pred_fallthru
      _
    // Predicated region
    $region18: #{tpu_custom_call.1} parent=1 // pred_check
      _
    $region19: #{tpu_custom_call.1} parent=1 // pred_check_branch
      %52 = sbr.rel (0) target = $region21
    $region20: #{tpu_custom_call.1} parent=1 // pred_region
      %s54 = ssub.s32 256, 256
      %55 = vsyncadd [#allocation7], %s54
      %s56 = sshll.u32 [#allocation8], 4
      %s57 = int_to_ptr.vmem [resolvable:$true] %s56
      %62 = dma.hbm_to_vmem [thread:$0]  %s4, 256, %s57, [#allocation7], 64, 64, 4
    $region21: #{tpu_custom_call.1} parent=1 // pred_fallthru
      _
    // Predicated region
    $region22: #{tpu_custom_call.1} parent=1 // pred_check
      _
    $region23: #{tpu_custom_call.1} parent=1 // pred_check_branch
      %64 = sbr.rel (0) target = $region25
    $region24: #{tpu_custom_call.1} parent=1 // pred_region
      %s66 = ssub.s32 16, 16
      %67 = vsyncadd [#allocation10], %s66
      %s69 = sshll.u32 [#allocation9], 4
      %s70 = int_to_ptr.vmem [resolvable:$true] %s69
      %72 = dma.hbm_to_vmem [thread:$0]  %s5, 16, %s70, [#allocation10]
    $region25: #{tpu_custom_call.1} parent=1 // pred_fallthru
      _
    // Predicated region
    $region26: #{tpu_custom_call.1} parent=1 // pred_check
      _
    $region27: #{tpu_custom_call.1} parent=1 // pred_check_branch
      %74 = sbr.rel (0) target = $region29
    $region28: #{tpu_custom_call.1} parent=1 // pred_region
      _
    $region29: #{tpu_custom_call.1} parent=1 // pred_fallthru
      _
    // Predicated region
    $region30: #{tpu_custom_call.1} parent=1 // pred_check
      _
    $region31: #{tpu_custom_call.1} parent=1 // pred_check_branch
      %76 = sbr.rel (0) target = $region33
    $region32: #{tpu_custom_call.1} parent=1 // pred_region
      %s78 = ssub.s32 16, 16
      %79 = vsyncadd [#allocation10], %s78
      %s81 = sshll.u32 [#allocation11], 4
      %s82 = int_to_ptr.vmem [resolvable:$true] %s81
      %84 = dma.hbm_to_vmem [thread:$0]  %s7, 16, %s82, [#allocation10]
    $region33: #{tpu_custom_call.1} parent=1 // pred_fallthru
      _
    // Predicated region
    $region34: #{tpu_custom_call.1} parent=1 // pred_check
      _
    $region35: #{tpu_custom_call.1} parent=1 // pred_check_branch
      %86 = sbr.rel (0) target = $region37
    $region36: #{tpu_custom_call.1} parent=1 // pred_region
      %s88 = ssub.s32 128, 128
      %89 = vsyncadd [#allocation13], %s88
      %s90 = sshll.u32 [#allocation12], 4
      %s91 = int_to_ptr.vmem [resolvable:$true] %s90
      %96 = dma.hbm_to_vmem [thread:$0]  %s8, 128, %s91, [#allocation13], 64, 64, 4
    $region37: #{tpu_custom_call.1} parent=1 // pred_fallthru
      _
    // Predicated region
    $region38: #{tpu_custom_call.1} parent=1 // pred_check
      _
    $region39: #{tpu_custom_call.1} parent=1 // pred_check_branch
      %98 = sbr.rel (0) target = $region41
    $region40: #{tpu_custom_call.1} parent=1 // pred_region
      _
    $region41: #{tpu_custom_call.1} parent=1 // pred_fallthru
      _
    // Predicated region
    $region42: #{tpu_custom_call.1} parent=1 // pred_check
      _
    $region43: #{tpu_custom_call.1} parent=1 // pred_check_branch
      %100 = sbr.rel (0) target = $region45
    $region44: #{tpu_custom_call.1} parent=1 // pred_region
      _
    $region45: #{tpu_custom_call.1} parent=1 // pred_fallthru
      _
    // Predicated region
    $region46: #{tpu_custom_call.1} parent=1 // pred_check
      _
    $region47: #{tpu_custom_call.1} parent=1 // pred_check_branch
      %102 = sbr.rel (0) target = $region49
    $region48: #{tpu_custom_call.1} parent=1 // pred_region
      _
    $region49: #{tpu_custom_call.1} parent=1 // pred_fallthru
      _
    // Predicated region
    $region50: #{tpu_custom_call.1} parent=1 // pred_check
      _
    $region51: #{tpu_custom_call.1} parent=1 // pred_check_branch
      %104 = sbr.rel (0) target = $region53
    $region52: #{tpu_custom_call.1} parent=1 // pred_region
      _
    $region53: #{tpu_custom_call.1} parent=1 // pred_fallthru
      _
    // Predicated region
    $region54: #{tpu_custom_call.1} parent=1 // pred_check
      _
    $region55: #{tpu_custom_call.1} parent=1 // pred_check_branch
      %106 = sbr.rel (0) target = $region57
    $region56: #{tpu_custom_call.1} parent=1 // pred_region
      _
    $region57: #{tpu_custom_call.1} parent=1 // pred_fallthru
      _
    // Predicated region
    $region58: #{tpu_custom_call.1} parent=1 // pred_check
      _
    $region59: #{tpu_custom_call.1} parent=1 // pred_check_branch
      %108 = sbr.rel (0) target = $region61
    $region60: #{tpu_custom_call.1} parent=1 // pred_region
      %109 = dma.done [#allocation4], 128
    $region61: #{tpu_custom_call.1} parent=1 // pred_fallthru
      _
    // Predicated region
    $region62: #{tpu_custom_call.1} parent=1 // pred_check
      _
    $region63: #{tpu_custom_call.1} parent=1 // pred_check_branch
      %111 = sbr.rel (0) target = $region65
    $region64: #{tpu_custom_call.1} parent=1 // pred_region
      %112 = dma.done [#allocation7], 128
    $region65: #{tpu_custom_call.1} parent=1 // pred_fallthru
      _
    // Predicated region
    $region66: #{tpu_custom_call.1} parent=1 // pred_check
      _
    $region67: #{tpu_custom_call.1} parent=1 // pred_check_branch
      %114 = sbr.rel (0) target = $region69
    $region68: #{tpu_custom_call.1} parent=1 // pred_region
      %115 = dma.done [#allocation7], 256
    $region69: #{tpu_custom_call.1} parent=1 // pred_fallthru
      _
    // Predicated region
    $region70: #{tpu_custom_call.1} parent=1 // pred_check
      _
    $region71: #{tpu_custom_call.1} parent=1 // pred_check_branch
      %117 = sbr.rel (0) target = $region73
    $region72: #{tpu_custom_call.1} parent=1 // pred_region
      %118 = dma.done [#allocation10], 16
    $region73: #{tpu_custom_call.1} parent=1 // pred_fallthru
      _
    // Predicated region
    $region74: #{tpu_custom_call.1} parent=1 // pred_check
      _
    $region75: #{tpu_custom_call.1} parent=1 // pred_check_branch
      %120 = sbr.rel (0) target = $region77
    $region76: #{tpu_custom_call.1} parent=1 // pred_region
      %121 = dma.done [#allocation10], 16
    $region77: #{tpu_custom_call.1} parent=1 // pred_fallthru
      _
    // Predicated region
    $region78: #{tpu_custom_call.1} parent=1 // pred_check
      _
    $region79: #{tpu_custom_call.1} parent=1 // pred_check_branch
      %123 = sbr.rel (0) target = $region81
    $region80: #{tpu_custom_call.1} parent=1 // pred_region
      %124 = dma.done [#allocation13], 128
    $region81: #{tpu_custom_call.1} parent=1 // pred_fallthru
      _
    %p126 = scmp.eq.s32.totalorder 0, 0
    // Predicated region
    $region82: #{tpu_custom_call.1} parent=1 // pred_check
      %p127 = pneg %p126
    $region83: #{tpu_custom_call.1} parent=1 // pred_check_branch
      %129 = sbr.rel (%p127) target = $region85
    $region84: #{tpu_custom_call.1} parent=1 // pred_region
      %v130 = vld [vmem:[#allocation3] sm:$0xff]
      %vm131 = vcmask 97280
      %132 = vst.msk [vmem:[#allocation2] sm:$0xff] %vm131, %v130
      %v133 = vld [vmem:[#allocation6] sm:$0xff]
      %134 = vst.msk [vmem:[#allocation2 + $0x8] sm:$0xff] %vm131, %v133
    $region85: #{tpu_custom_call.1} parent=1 // pred_fallthru
      _
    %v135 = vld [vmem:[#allocation2] sm:$0xff]
    %v136 = vld [vmem:[#allocation2 + $0x8] sm:$0xff]
    %v137 = vld [vmem:[%s0] sm:$0xf]
    %v138 = vld [vmem:[%s3] sm:$0xf]
    %v139 = vld [vmem:[%s3 + $0x4] sm:$0x3]
    %v140 = vpack.c.bf16 %v136, %v135
    %v143 = vunpack.c.l.b16 %v138
    %v144 = vunpack.c.l.b16 %v139
    %v145 = vpack.c.b16 %v144, %v143
    %vm146 = vcmask 97280
    %v148 = vsel %vm146, %v140, 0
    %vm150 = vcmask 1045504
    %v152 = vsel %vm150, %v145, 0
    %154 = vmatprep.subr.bf16.mxu0 0
    %155 = vmatpush1.bf16.msra.mxu0 %v152
    %156 = vmatprep.subr.bf16.mxu0 0
    %157 = vmatpush1.bf16.msra.mxu0 0
    %158 = vmatprep.subr.bf16.mxu0 0
    %159 = vmatpush1.bf16.msra.mxu0 0
    %160 = vmatprep.subr.bf16.mxu0 0
    %161 = vmatpush1.bf16.msra.mxu0 0
    %162 = vmatprep.subr.bf16.mxu0 0
    %163 = vmatpush1.bf16.msra.mxu0 0
    %164 = vmatprep.subr.bf16.mxu0 0
    %165 = vmatpush1.bf16.msra.mxu0 0
    %166 = vmatprep.subr.bf16.mxu0 0
    %167 = vmatpush1.bf16.msra.mxu0 0
    %168 = vmatprep.subr.bf16.mxu0 0
    %169 = vmatpush1.bf16.msra.mxu0 0
    %170 = vmatprep.subr.bf16.mxu0 0
    %171 = vmatpush1.bf16.msra.mxu0 0
    %172 = vmatprep.subr.bf16.mxu0 0
    %173 = vmatpush1.bf16.msra.mxu0 0
    %174 = vmatprep.subr.bf16.mxu0 0
    %175 = vmatpush1.bf16.msra.mxu0 0
    %176 = vmatprep.subr.bf16.mxu0 0
    %177 = vmatpush1.bf16.msra.mxu0 0
    %178 = vmatprep.subr.bf16.mxu0 0
    %179 = vmatpush1.bf16.msra.mxu0 0
    %180 = vmatprep.subr.bf16.mxu0 0
    %181 = vmatpush1.bf16.msra.mxu0 0
    %182 = vmatprep.subr.bf16.mxu0 0
    %183 = vmatpush1.bf16.msra.mxu0 0
    %184 = vmatprep.subr.bf16.mxu0 0
    %185 = vmatpush1.bf16.msra.mxu0 0
    %186 = vmatprep.mubr.bf16.mxu0 0
    %187 = vmatmul.mubr.bf16.gmra.mrb[0].mxu0 %v148
    %v188 = vpop.f32.mrb[0].mxu0
    %v189 = vadd.f32 0.0, %v188
    %v190 = vpop.f32.mrb[0].mxu0
    %v191 = vpop.f32.mrb[0].mxu0
    %v192 = vadd.f32 0.0, %v191
    %v193 = vpop.f32.mrb[0].mxu0
    %194 = vdwg.mxu0
    %v195 = vunpack.c.l.bf16 %v137
    %v196 = vadd.f32 %v189, %v195
    %v197 = vadd.f32 %v192, %v195
    %vm198 = vcmp.ge.f32.partialorder %v196, 0.0
    %vm199 = vcmp.ge.f32.partialorder %v197, 0.0
    %v200 = vmul.f32 %v196, 0.25
    %v201 = vmul.f32 %v197, 0.25
    %v202 = vsel %vm198, %v196, %v200
    %v203 = vsel %vm199, %v197, %v201
    %v204 = vld [vmem:[#allocation8] sm:$0xf]
    %v205 = vld [vmem:[#allocation8 + $0x4] sm:$0xf]
    %v206 = vld [vmem:[#allocation8 + $0x8] sm:$0xf]
    %v207 = vld [vmem:[#allocation8 + $0xc] sm:$0xf]
    %v208 = vpack.c.bf16 %v203, %v202
    %v209 = vld [vmem:[#allocation9] sm:$0x1]
    %v211 = vlaneseq
    %v212 = vshrl.u32 %v211, 7
    %v213 = vsub.s32 0, %v212
    %v214 = vrot.slane %v209, %v213
    %v220 = vunpack.c.l.b16 %v204
    %v221 = vunpack.c.l.b16 %v205
    %v222 = vunpack.c.l.b16 %v206
    %v223 = vunpack.c.l.b16 %v207
    %v224 = vpack.c.b16 %v221, %v220
    %v225 = vpack.c.b16 %v223, %v222
    %vm228 = vcmask 261120
    %v230 = vsel %vm228, %v208, 0
    %232 = vmatprep.subr.bf16.mxu0 0
    %233 = vmatpush1.bf16.msra.mxu0 %v224
    %234 = vmatprep.subr.bf16.mxu0 0
    %235 = vmatpush1.bf16.msra.mxu0 %v225
    %236 = vmatprep.subr.bf16.mxu0 0
    %237 = vmatpush1.bf16.msra.mxu0 0
    %238 = vmatprep.subr.bf16.mxu0 0
    %239 = vmatpush1.bf16.msra.mxu0 0
    %240 = vmatprep.subr.bf16.mxu0 0
    %241 = vmatpush1.bf16.msra.mxu0 0
    %242 = vmatprep.subr.bf16.mxu0 0
    %243 = vmatpush1.bf16.msra.mxu0 0
    %244 = vmatprep.subr.bf16.mxu0 0
    %245 = vmatpush1.bf16.msra.mxu0 0
    %246 = vmatprep.subr.bf16.mxu0 0
    %247 = vmatpush1.bf16.msra.mxu0 0
    %248 = vmatprep.subr.bf16.mxu0 0
    %249 = vmatpush1.bf16.msra.mxu0 0
    %250 = vmatprep.subr.bf16.mxu0 0
    %251 = vmatpush1.bf16.msra.mxu0 0
    %252 = vmatprep.subr.bf16.mxu0 0
    %253 = vmatpush1.bf16.msra.mxu0 0
    %254 = vmatprep.subr.bf16.mxu0 0
    %255 = vmatpush1.bf16.msra.mxu0 0
    %256 = vmatprep.subr.bf16.mxu0 0
    %257 = vmatpush1.bf16.msra.mxu0 0
    %258 = vmatprep.subr.bf16.mxu0 0
    %259 = vmatpush1.bf16.msra.mxu0 0
    %260 = vmatprep.subr.bf16.mxu0 0
    %261 = vmatpush1.bf16.msra.mxu0 0
    %262 = vmatprep.subr.bf16.mxu0 0
    %263 = vmatpush1.bf16.msra.mxu0 0
    %264 = vmatprep.mubr.bf16.mxu0 0
    %265 = vmatmul.mubr.bf16.gmra.mrb[0].mxu0 %v230
    %v266 = vpop.f32.mrb[0].mxu0
    %v267 = vadd.f32 %v214, %v266
    %v268 = vpop.f32.mrb[0].mxu0
    %v269 = vpop.f32.mrb[0].mxu0
    %v270 = vadd.f32 %v214, %v269
    %v271 = vpop.f32.mrb[0].mxu0
    %272 = vdwg.mxu0
    %vm273 = vcmp.ge.f32.partialorder %v267, 0.0
    %vm274 = vcmp.ge.f32.partialorder %v270, 0.0
    %v275 = vmul.f32 %v267, 0.25
    %v276 = vmul.f32 %v270, 0.25
    %v277 = vsel %vm273, %v267, %v275
    %v278 = vsel %vm274, %v270, %v276
    %v279 = vadd.f32 %v202, %v277
    %v280 = vadd.f32 %v203, %v278
    %v281 = vld [vmem:[%s6] sm:$0xf]
    %v282 = vld [vmem:[%s6 + $0x4] sm:$0xf]
    %v283 = vld [vmem:[%s6 + $0x8] sm:$0xf]
    %v284 = vld [vmem:[%s6 + $0xc] sm:$0xf]
    %v285 = vpack.c.bf16 %v280, %v279
    %v286 = vld [vmem:[#allocation11] sm:$0x1]
    %v288 = vlaneseq
    %v289 = vshrl.u32 %v288, 7
    %v290 = vsub.s32 0, %v289
    %v291 = vrot.slane %v286, %v290
    %v297 = vunpack.c.l.b16 %v281
    %v298 = vunpack.c.l.b16 %v282
    %v299 = vunpack.c.l.b16 %v283
    %v300 = vunpack.c.l.b16 %v284
    %v301 = vpack.c.b16 %v298, %v297
    %v302 = vpack.c.b16 %v300, %v299
    %v306 = vsel %vm228, %v285, 0
    %308 = vmatprep.subr.bf16.mxu0 0
    %309 = vmatpush1.bf16.msra.mxu0 %v301
    %310 = vmatprep.subr.bf16.mxu0 0
    %311 = vmatpush1.bf16.msra.mxu0 %v302
    %312 = vmatprep.subr.bf16.mxu0 0
    %313 = vmatpush1.bf16.msra.mxu0 0
    %314 = vmatprep.subr.bf16.mxu0 0
    %315 = vmatpush1.bf16.msra.mxu0 0
    %316 = vmatprep.subr.bf16.mxu0 0
    %317 = vmatpush1.bf16.msra.mxu0 0
    %318 = vmatprep.subr.bf16.mxu0 0
    %319 = vmatpush1.bf16.msra.mxu0 0
    %320 = vmatprep.subr.bf16.mxu0 0
    %321 = vmatpush1.bf16.msra.mxu0 0
    %322 = vmatprep.subr.bf16.mxu0 0
    %323 = vmatpush1.bf16.msra.mxu0 0
    %324 = vmatprep.subr.bf16.mxu0 0
    %325 = vmatpush1.bf16.msra.mxu0 0
    %326 = vmatprep.subr.bf16.mxu0 0
    %327 = vmatpush1.bf16.msra.mxu0 0
    %328 = vmatprep.subr.bf16.mxu0 0
    %329 = vmatpush1.bf16.msra.mxu0 0
    %330 = vmatprep.subr.bf16.mxu0 0
    %331 = vmatpush1.bf16.msra.mxu0 0
    %332 = vmatprep.subr.bf16.mxu0 0
    %333 = vmatpush1.bf16.msra.mxu0 0
    %334 = vmatprep.subr.bf16.mxu0 0
    %335 = vmatpush1.bf16.msra.mxu0 0
    %336 = vmatprep.subr.bf16.mxu0 0
    %337 = vmatpush1.bf16.msra.mxu0 0
    %338 = vmatprep.subr.bf16.mxu0 0
    %339 = vmatpush1.bf16.msra.mxu0 0
    %340 = vmatprep.mubr.bf16.mxu0 0
    %341 = vmatmul.mubr.bf16.gmra.mrb[0].mxu0 %v306
    %v342 = vpop.f32.mrb[0].mxu0
    %v343 = vadd.f32 %v291, %v342
    %v344 = vpop.f32.mrb[0].mxu0
    %v345 = vpop.f32.mrb[0].mxu0
    %v346 = vadd.f32 %v291, %v345
    %v347 = vpop.f32.mrb[0].mxu0
    %348 = vdwg.mxu0
    %vm349 = vcmask 31744
    %350 = vst.msk [vmem:[#allocation14] sm:$0xff] %vm349, %v343
    %351 = vst.msk [vmem:[#allocation15] sm:$0xff] %vm349, %v346
    %352 = vst.msk [vmem:[#allocation2] sm:$0xff] %vm349, %v343
    %353 = vst.msk [vmem:[#allocation2 + $0x8] sm:$0xff] %vm349, %v346
    %v354 = vld [vmem:[#allocation2 + $0x8] sm:$0xff]
    %v355 = vld [vmem:[#allocation12] sm:$0xf]
    %v356 = vld [vmem:[#allocation12 + $0x4] sm:$0x3]
    %v357 = vpack.c.bf16 %v354, %v354
    %v358 = vld [vmem:[%s9] sm:$0x1]
    %v360 = vlaneseq
    %v361 = vshrl.u32 %v360, 7
    %v362 = vsub.s32 0, %v361
    %v363 = vrot.slane %v358, %v362
    %v367 = vunpack.c.l.b16 %v355
    %v368 = vunpack.c.l.b16 %v356
    %v369 = vpack.c.b16 %v368, %v367
    %v371 = vsel %vm146, %v357, 0
    %v374 = vsel %vm150, %v369, 0
    %376 = vmatprep.subr.bf16.mxu0 0
    %377 = vmatpush1.bf16.msra.mxu0 %v374
    %378 = vmatprep.subr.bf16.mxu0 0
    %379 = vmatpush1.bf16.msra.mxu0 0
    %380 = vmatprep.subr.bf16.mxu0 0
    %381 = vmatpush1.bf16.msra.mxu0 0
    %382 = vmatprep.subr.bf16.mxu0 0
    %383 = vmatpush1.bf16.msra.mxu0 0
    %384 = vmatprep.subr.bf16.mxu0 0
    %385 = vmatpush1.bf16.msra.mxu0 0
    %386 = vmatprep.subr.bf16.mxu0 0
    %387 = vmatpush1.bf16.msra.mxu0 0
    %388 = vmatprep.subr.bf16.mxu0 0
    %389 = vmatpush1.bf16.msra.mxu0 0
    %390 = vmatprep.subr.bf16.mxu0 0
    %391 = vmatpush1.bf16.msra.mxu0 0
    %392 = vmatprep.subr.bf16.mxu0 0
    %393 = vmatpush1.bf16.msra.mxu0 0
    %394 = vmatprep.subr.bf16.mxu0 0
    %395 = vmatpush1.bf16.msra.mxu0 0
    %396 = vmatprep.subr.bf16.mxu0 0
    %397 = vmatpush1.bf16.msra.mxu0 0
    %398 = vmatprep.subr.bf16.mxu0 0
    %399 = vmatpush1.bf16.msra.mxu0 0
    %400 = vmatprep.subr.bf16.mxu0 0
    %401 = vmatpush1.bf16.msra.mxu0 0
    %402 = vmatprep.subr.bf16.mxu0 0
    %403 = vmatpush1.bf16.msra.mxu0 0
    %404 = vmatprep.subr.bf16.mxu0 0
    %405 = vmatpush1.bf16.msra.mxu0 0
    %406 = vmatprep.subr.bf16.mxu0 0
    %407 = vmatpush1.bf16.msra.mxu0 0
    %408 = vmatprep.mubr.bf16.mxu0 0
    %409 = vmatmul.mubr.bf16.gmra.mrb[0].mxu0 %v371
    %v410 = vpop.f32.mrb[0].mxu0
    %v411 = vadd.f32 %v363, %v410
    %v412 = vpop.f32.mrb[0].mxu0
    %v413 = vpop.f32.mrb[0].mxu0
    %v414 = vpop.f32.mrb[0].mxu0
    %415 = vdwg.mxu0
    %vm416 = vcmp.ge.f32.partialorder %v411, 0.0
    %v417 = vmul.f32 %v411, 0.25
    %v418 = vsel %vm416, %v411, %v417
    %v419 = vld [vmem:[%s10] sm:$0xf]
    %v420 = vld [vmem:[%s10 + $0x4] sm:$0xf]
    %v421 = vld [vmem:[%s10 + $0x8] sm:$0xf]
    %v422 = vld [vmem:[%s10 + $0xc] sm:$0xf]
    %v423 = vld [vmem:[%s10 + $0x10] sm:$0xf]
    %v424 = vld [vmem:[%s10 + $0x14] sm:$0xf]
    %v425 = vld [vmem:[%s10 + $0x18] sm:$0xf]
    %v426 = vld [vmem:[%s10 + $0x1c] sm:$0xf]
    %v427 = vld [vmem:[%s10 + $0x20] sm:$0xf]
    %v428 = vld [vmem:[%s10 + $0x24] sm:$0xf]
    %v429 = vld [vmem:[%s10 + $0x28] sm:$0xf]
    %v430 = vld [vmem:[%s10 + $0x2c] sm:$0xf]
    %v431 = vpack.c.bf16 %v418, %v418
    %v432 = vld [vmem:[%s11] sm:$0x1]
    %v434 = vlaneseq
    %v435 = vshrl.u32 %v434, 7
    %v436 = vsub.s32 0, %v435
    %v437 = vrot.slane %v432, %v436
    %v451 = vunpack.c.l.b16 %v419
    %v452 = vunpack.c.l.b16 %v420
    %v453 = vunpack.c.l.b16 %v421
    %v454 = vunpack.c.l.b16 %v422
    %v455 = vunpack.c.l.b16 %v423
    %v456 = vunpack.c.l.b16 %v424
    %v457 = vunpack.c.l.b16 %v425
    %v458 = vunpack.c.l.b16 %v426
    %v459 = vunpack.c.l.b16 %v427
    %v460 = vunpack.c.l.b16 %v428
    %v461 = vunpack.c.l.b16 %v429
    %v462 = vunpack.c.l.b16 %v430
    %v463 = vpack.c.b16 %v452, %v451
    %v464 = vpack.c.b16 %v454, %v453
    %v465 = vpack.c.b16 %v456, %v455
    %v466 = vpack.c.b16 %v458, %v457
    %v467 = vpack.c.b16 %v460, %v459
    %v468 = vpack.c.b16 %v462, %v461
    %vm475 = vcmask 785408
    %v477 = vsel %vm475, %v431, 0
    %479 = vmatprep.subr.bf16.mxu0 0
    %480 = vmatpush1.bf16.msra.mxu0 %v463
    %481 = vmatprep.subr.bf16.mxu0 0
    %482 = vmatpush1.bf16.msra.mxu0 %v464
    %483 = vmatprep.subr.bf16.mxu0 0
    %484 = vmatpush1.bf16.msra.mxu0 %v465
    %485 = vmatprep.subr.bf16.mxu0 0
    %486 = vmatpush1.bf16.msra.mxu0 %v466
    %487 = vmatprep.subr.bf16.mxu0 0
    %488 = vmatpush1.bf16.msra.mxu0 %v467
    %489 = vmatprep.subr.bf16.mxu0 0
    %490 = vmatpush1.bf16.msra.mxu0 %v468
    %491 = vmatprep.subr.bf16.mxu0 0
    %492 = vmatpush1.bf16.msra.mxu0 0
    %493 = vmatprep.subr.bf16.mxu0 0
    %494 = vmatpush1.bf16.msra.mxu0 0
    %495 = vmatprep.subr.bf16.mxu0 0
    %496 = vmatpush1.bf16.msra.mxu0 0
    %497 = vmatprep.subr.bf16.mxu0 0
    %498 = vmatpush1.bf16.msra.mxu0 0
    %499 = vmatprep.subr.bf16.mxu0 0
    %500 = vmatpush1.bf16.msra.mxu0 0
    %501 = vmatprep.subr.bf16.mxu0 0
    %502 = vmatpush1.bf16.msra.mxu0 0
    %503 = vmatprep.subr.bf16.mxu0 0
    %504 = vmatpush1.bf16.msra.mxu0 0
    %505 = vmatprep.subr.bf16.mxu0 0
    %506 = vmatpush1.bf16.msra.mxu0 0
    %507 = vmatprep.subr.bf16.mxu0 0
    %508 = vmatpush1.bf16.msra.mxu0 0
    %509 = vmatprep.subr.bf16.mxu0 0
    %510 = vmatpush1.bf16.msra.mxu0 0
    %511 = vmatprep.mubr.bf16.mxu0 0
    %512 = vmatmul.mubr.bf16.gmra.mrb[0].mxu0 %v477
    %v513 = vpop.f32.mrb[0].mxu0
    %v514 = vadd.f32 %v437, %v513
    %v515 = vpop.f32.mrb[0].mxu0
    %v516 = vpop.f32.mrb[0].mxu0
    %v517 = vpop.f32.mrb[0].mxu0
    %518 = vdwg.mxu0
    %vm519 = vcmp.ge.f32.partialorder %v514, 0.0
    %v520 = vmul.f32 %v514, 0.25
    %v521 = vsel %vm519, %v514, %v520
    %v522 = vadd.f32 %v418, %v521
    %v523 = vld [vmem:[%s12] sm:$0xf]
    %v524 = vld [vmem:[%s12 + $0x4] sm:$0xf]
    %v525 = vld [vmem:[%s12 + $0x8] sm:$0xf]
    %v526 = vld [vmem:[%s12 + $0xc] sm:$0xf]
    %v527 = vld [vmem:[%s12 + $0x10] sm:$0xf]
    %v528 = vld [vmem:[%s12 + $0x14] sm:$0xf]
    %v529 = vld [vmem:[%s12 + $0x18] sm:$0xf]
    %v530 = vld [vmem:[%s12 + $0x1c] sm:$0xf]
    %v531 = vld [vmem:[%s12 + $0x20] sm:$0xf]
    %v532 = vld [vmem:[%s12 + $0x24] sm:$0xf]
    %v533 = vld [vmem:[%s12 + $0x28] sm:$0xf]
    %v534 = vld [vmem:[%s12 + $0x2c] sm:$0xf]
    %v535 = vpack.c.bf16 %v522, %v522
    %v536 = vld [vmem:[%s13] sm:$0x1]
    %v538 = vlaneseq
    %v539 = vshrl.u32 %v538, 7
    %v540 = vsub.s32 0, %v539
    %v541 = vrot.slane %v536, %v540
    %v555 = vunpack.c.l.b16 %v523
    %v556 = vunpack.c.l.b16 %v524
    %v557 = vunpack.c.l.b16 %v525
    %v558 = vunpack.c.l.b16 %v526
    %v559 = vunpack.c.l.b16 %v527
    %v560 = vunpack.c.l.b16 %v528
    %v561 = vunpack.c.l.b16 %v529
    %v562 = vunpack.c.l.b16 %v530
    %v563 = vunpack.c.l.b16 %v531
    %v564 = vunpack.c.l.b16 %v532
    %v565 = vunpack.c.l.b16 %v533
    %v566 = vunpack.c.l.b16 %v534
    %v567 = vpack.c.b16 %v556, %v555
    %v568 = vpack.c.b16 %v558, %v557
    %v569 = vpack.c.b16 %v560, %v559
    %v570 = vpack.c.b16 %v562, %v561
    %v571 = vpack.c.b16 %v564, %v563
    %v572 = vpack.c.b16 %v566, %v565
    %v580 = vsel %vm475, %v535, 0
    %582 = vmatprep.subr.bf16.mxu0 0
    %583 = vmatpush1.bf16.msra.mxu0 %v567
    %584 = vmatprep.subr.bf16.mxu0 0
    %585 = vmatpush1.bf16.msra.mxu0 %v568
    %586 = vmatprep.subr.bf16.mxu0 0
    %587 = vmatpush1.bf16.msra.mxu0 %v569
    %588 = vmatprep.subr.bf16.mxu0 0
    %589 = vmatpush1.bf16.msra.mxu0 %v570
    %590 = vmatprep.subr.bf16.mxu0 0
    %591 = vmatpush1.bf16.msra.mxu0 %v571
    %592 = vmatprep.subr.bf16.mxu0 0
    %593 = vmatpush1.bf16.msra.mxu0 %v572
    %594 = vmatprep.subr.bf16.mxu0 0
    %595 = vmatpush1.bf16.msra.mxu0 0
    %596 = vmatprep.subr.bf16.mxu0 0
    %597 = vmatpush1.bf16.msra.mxu0 0
    %598 = vmatprep.subr.bf16.mxu0 0
    %599 = vmatpush1.bf16.msra.mxu0 0
    %600 = vmatprep.subr.bf16.mxu0 0
    %601 = vmatpush1.bf16.msra.mxu0 0
    %602 = vmatprep.subr.bf16.mxu0 0
    %603 = vmatpush1.bf16.msra.mxu0 0
    %604 = vmatprep.subr.bf16.mxu0 0
    %605 = vmatpush1.bf16.msra.mxu0 0
    %606 = vmatprep.subr.bf16.mxu0 0
    %607 = vmatpush1.bf16.msra.mxu0 0
    %608 = vmatprep.subr.bf16.mxu0 0
    %609 = vmatpush1.bf16.msra.mxu0 0
    %610 = vmatprep.subr.bf16.mxu0 0
    %611 = vmatpush1.bf16.msra.mxu0 0
    %612 = vmatprep.subr.bf16.mxu0 0
    %613 = vmatpush1.bf16.msra.mxu0 0
    %614 = vmatprep.mubr.bf16.mxu0 0
    %615 = vmatmul.mubr.bf16.gmra.mrb[0].mxu0 %v580
    %v616 = vpop.f32.mrb[0].mxu0
    %v617 = vadd.f32 %v541, %v616
    %v618 = vpop.f32.mrb[0].mxu0
    %v619 = vpop.f32.mrb[0].mxu0
    %v620 = vpop.f32.mrb[0].mxu0
    %621 = vdwg.mxu0
    %v622 = vadd.f32 %v354, %v617
    %623 = vst.msk [vmem:[#allocation2 + $0x8] sm:$0xff] %vm146, %v622
    %v624 = vld [vmem:[#allocation2] sm:$0xff]
    %v625 = vld [vmem:[#allocation2 + $0x8] sm:$0xff]
    %s626 = scalar_lea.vmem %s0, 4
    %v627 = vld [vmem:[%s626] sm:$0xf]
    %s628 = scalar_lea.vmem %s3, 8
    %v629 = vld [vmem:[%s628] sm:$0xf]
    %v630 = vld [vmem:[%s628 + $0x4] sm:$0x3]
    %v631 = vpack.c.bf16 %v625, %v624
    %v634 = vunpack.c.l.b16 %v629
    %v635 = vunpack.c.l.b16 %v630
    %v636 = vpack.c.b16 %v635, %v634
    %v638 = vsel %vm146, %v631, 0
    %v641 = vsel %vm150, %v636, 0
    %643 = vmatprep.subr.bf16.mxu0 0
    %644 = vmatpush1.bf16.msra.mxu0 %v641
    %645 = vmatprep.subr.bf16.mxu0 0
    %646 = vmatpush1.bf16.msra.mxu0 0
    %647 = vmatprep.subr.bf16.mxu0 0
    %648 = vmatpush1.bf16.msra.mxu0 0
    %649 = vmatprep.subr.bf16.mxu0 0
    %650 = vmatpush1.bf16.msra.mxu0 0
    %651 = vmatprep.subr.bf16.mxu0 0
    %652 = vmatpush1.bf16.msra.mxu0 0
    %653 = vmatprep.subr.bf16.mxu0 0
    %654 = vmatpush1.bf16.msra.mxu0 0
    %655 = vmatprep.subr.bf16.mxu0 0
    %656 = vmatpush1.bf16.msra.mxu0 0
    %657 = vmatprep.subr.bf16.mxu0 0
    %658 = vmatpush1.bf16.msra.mxu0 0
    %659 = vmatprep.subr.bf16.mxu0 0
    %660 = vmatpush1.bf16.msra.mxu0 0
    %661 = vmatprep.subr.bf16.mxu0 0
    %662 = vmatpush1.bf16.msra.mxu0 0
    %663 = vmatprep.subr.bf16.mxu0 0
    %664 = vmatpush1.bf16.msra.mxu0 0
    %665 = vmatprep.subr.bf16.mxu0 0
    %666 = vmatpush1.bf16.msra.mxu0 0
    %667 = vmatprep.subr.bf16.mxu0 0
    %668 = vmatpush1.bf16.msra.mxu0 0
    %669 = vmatprep.subr.bf16.mxu0 0
    %670 = vmatpush1.bf16.msra.mxu0 0
    %671 = vmatprep.subr.bf16.mxu0 0
    %672 = vmatpush1.bf16.msra.mxu0 0
    %673 = vmatprep.subr.bf16.mxu0 0
    %674 = vmatpush1.bf16.msra.mxu0 0
    %675 = vmatprep.mubr.bf16.mxu0 0
    %676 = vmatmul.mubr.bf16.gmra.mrb[0].mxu0 %v638
    %v677 = vpop.f32.mrb[0].mxu0
    %v678 = vadd.f32 0.0, %v677
    %v679 = vpop.f32.mrb[0].mxu0
    %v680 = vpop.f32.mrb[0].mxu0
    %v681 = vadd.f32 0.0, %v680
    %v682 = vpop.f32.mrb[0].mxu0
    %683 = vdwg.mxu0
    %v684 = vunpack.c.l.bf16 %v627
    %v685 = vadd.f32 %v678, %v684
    %v686 = vadd.f32 %v681, %v684
    %vm687 = vcmp.ge.f32.partialorder %v685, 0.0
    %vm688 = vcmp.ge.f32.partialorder %v686, 0.0
    %v689 = vmul.f32 %v685, 0.25
    %v690 = vmul.f32 %v686, 0.25
    %v691 = vsel %vm687, %v685, %v689
    %v692 = vsel %vm688, %v686, %v690
    %v693 = vld [vmem:[#allocation8] sm:$0xf]
    %v694 = vld [vmem:[#allocation8 + $0x4] sm:$0xf]
    %v695 = vld [vmem:[#allocation8 + $0x8] sm:$0xf]
    %v696 = vld [vmem:[#allocation8 + $0xc] sm:$0xf]
    %v697 = vpack.c.bf16 %v692, %v691
    %v698 = vld [vmem:[#allocation9] sm:$0x1]
    %v700 = vlaneseq
    %v701 = vshrl.u32 %v700, 7
    %v702 = vsub.s32 0, %v701
    %v703 = vrot.slane %v698, %v702
    %v709 = vunpack.c.l.b16 %v693
    %v710 = vunpack.c.l.b16 %v694
    %v711 = vunpack.c.l.b16 %v695
    %v712 = vunpack.c.l.b16 %v696
    %v713 = vpack.c.b16 %v710, %v709
    %v714 = vpack.c.b16 %v712, %v711
    %v718 = vsel %vm228, %v697, 0
    %720 = vmatprep.subr.bf16.mxu0 0
    %721 = vmatpush1.bf16.msra.mxu0 %v713
    %722 = vmatprep.subr.bf16.mxu0 0
    %723 = vmatpush1.bf16.msra.mxu0 %v714
    %724 = vmatprep.subr.bf16.mxu0 0
    %725 = vmatpush1.bf16.msra.mxu0 0
    %726 = vmatprep.subr.bf16.mxu0 0
    %727 = vmatpush1.bf16.msra.mxu0 0
    %728 = vmatprep.subr.bf16.mxu0 0
    %729 = vmatpush1.bf16.msra.mxu0 0
    %730 = vmatprep.subr.bf16.mxu0 0
    %731 = vmatpush1.bf16.msra.mxu0 0
    %732 = vmatprep.subr.bf16.mxu0 0
    %733 = vmatpush1.bf16.msra.mxu0 0
    %734 = vmatprep.subr.bf16.mxu0 0
    %735 = vmatpush1.bf16.msra.mxu0 0
    %736 = vmatprep.subr.bf16.mxu0 0
    %737 = vmatpush1.bf16.msra.mxu0 0
    %738 = vmatprep.subr.bf16.mxu0 0
    %739 = vmatpush1.bf16.msra.mxu0 0
    %740 = vmatprep.subr.bf16.mxu0 0
    %741 = vmatpush1.bf16.msra.mxu0 0
    %742 = vmatprep.subr.bf16.mxu0 0
    %743 = vmatpush1.bf16.msra.mxu0 0
    %744 = vmatprep.subr.bf16.mxu0 0
    %745 = vmatpush1.bf16.msra.mxu0 0
    %746 = vmatprep.subr.bf16.mxu0 0
    %747 = vmatpush1.bf16.msra.mxu0 0
    %748 = vmatprep.subr.bf16.mxu0 0
    %749 = vmatpush1.bf16.msra.mxu0 0
    %750 = vmatprep.subr.bf16.mxu0 0
    %751 = vmatpush1.bf16.msra.mxu0 0
    %752 = vmatprep.mubr.bf16.mxu0 0
    %753 = vmatmul.mubr.bf16.gmra.mrb[0].mxu0 %v718
    %v754 = vpop.f32.mrb[0].mxu0
    %v755 = vadd.f32 %v703, %v754
    %v756 = vpop.f32.mrb[0].mxu0
    %v757 = vpop.f32.mrb[0].mxu0
    %v758 = vadd.f32 %v703, %v757
    %v759 = vpop.f32.mrb[0].mxu0
    %760 = vdwg.mxu0
    %vm761 = vcmp.ge.f32.partialorder %v755, 0.0
    %vm762 = vcmp.ge.f32.partialorder %v758, 0.0
    %v763 = vmul.f32 %v755, 0.25
    %v764 = vmul.f32 %v758, 0.25
    %v765 = vsel %vm761, %v755, %v763
    %v766 = vsel %vm762, %v758, %v764
    %v767 = vadd.f32 %v691, %v765
    %v768 = vadd.f32 %v692, %v766
    %v769 = vld [vmem:[%s6] sm:$0xf]
    %v770 = vld [vmem:[%s6 + $0x4] sm:$0xf]
    %v771 = vld [vmem:[%s6 + $0x8] sm:$0xf]
    %v772 = vld [vmem:[%s6 + $0xc] sm:$0xf]
    %v773 = vpack.c.bf16 %v768, %v767
    %v774 = vld [vmem:[#allocation11] sm:$0x1]
    %v776 = vlaneseq
    %v777 = vshrl.u32 %v776, 7
    %v778 = vsub.s32 0, %v777
    %v779 = vrot.slane %v774, %v778
    %v785 = vunpack.c.l.b16 %v769
    %v786 = vunpack.c.l.b16 %v770
    %v787 = vunpack.c.l.b16 %v771
    %v788 = vunpack.c.l.b16 %v772
    %v789 = vpack.c.b16 %v786, %v785
    %v790 = vpack.c.b16 %v788, %v787
    %v794 = vsel %vm228, %v773, 0
    %796 = vmatprep.subr.bf16.mxu0 0
    %797 = vmatpush1.bf16.msra.mxu0 %v789
    %798 = vmatprep.subr.bf16.mxu0 0
    %799 = vmatpush1.bf16.msra.mxu0 %v790
    %800 = vmatprep.subr.bf16.mxu0 0
    %801 = vmatpush1.bf16.msra.mxu0 0
    %802 = vmatprep.subr.bf16.mxu0 0
    %803 = vmatpush1.bf16.msra.mxu0 0
    %804 = vmatprep.subr.bf16.mxu0 0
    %805 = vmatpush1.bf16.msra.mxu0 0
    %806 = vmatprep.subr.bf16.mxu0 0
    %807 = vmatpush1.bf16.msra.mxu0 0
    %808 = vmatprep.subr.bf16.mxu0 0
    %809 = vmatpush1.bf16.msra.mxu0 0
    %810 = vmatprep.subr.bf16.mxu0 0
    %811 = vmatpush1.bf16.msra.mxu0 0
    %812 = vmatprep.subr.bf16.mxu0 0
    %813 = vmatpush1.bf16.msra.mxu0 0
    %814 = vmatprep.subr.bf16.mxu0 0
    %815 = vmatpush1.bf16.msra.mxu0 0
    %816 = vmatprep.subr.bf16.mxu0 0
    %817 = vmatpush1.bf16.msra.mxu0 0
    %818 = vmatprep.subr.bf16.mxu0 0
    %819 = vmatpush1.bf16.msra.mxu0 0
    %820 = vmatprep.subr.bf16.mxu0 0
    %821 = vmatpush1.bf16.msra.mxu0 0
    %822 = vmatprep.subr.bf16.mxu0 0
    %823 = vmatpush1.bf16.msra.mxu0 0
    %824 = vmatprep.subr.bf16.mxu0 0
    %825 = vmatpush1.bf16.msra.mxu0 0
    %826 = vmatprep.subr.bf16.mxu0 0
    %827 = vmatpush1.bf16.msra.mxu0 0
    %828 = vmatprep.mubr.bf16.mxu0 0
    %829 = vmatmul.mubr.bf16.gmra.mrb[0].mxu0 %v794
    %v830 = vpop.f32.mrb[0].mxu0
    %v831 = vadd.f32 %v779, %v830
    %v832 = vpop.f32.mrb[0].mxu0
    %v833 = vpop.f32.mrb[0].mxu0
    %v834 = vadd.f32 %v779, %v833
    %v835 = vpop.f32.mrb[0].mxu0
    %836 = vdwg.mxu0
    %838 = vrot.lane.b32.xlu0 %v831, 4
    %v839 = vpop.permute.xlu0 %838
    %vm841 = vcmask 64544
    %842 = vst.msk [vmem:[#allocation14] sm:$0xff] %vm841, %v839
    %844 = vrot.lane.b32.xlu0 %v834, 4
    %v845 = vpop.permute.xlu0 %844
    %847 = vst.msk [vmem:[#allocation15] sm:$0xff] %vm841, %v845
    %848 = vst.msk [vmem:[#allocation2] sm:$0xff] %vm841, %v839
    %849 = vst.msk [vmem:[#allocation2 + $0x8] sm:$0xff] %vm841, %v845
    %v850 = vld [vmem:[#allocation2] sm:$0xff]
    %v851 = vld [vmem:[#allocation2 + $0x8] sm:$0xff]
    %s852 = scalar_lea.vmem %s0, 8
    %v853 = vld [vmem:[%s852] sm:$0xf]
    %s854 = scalar_lea.vmem %s3, 16
    %v855 = vld [vmem:[%s854] sm:$0xf]
    %v856 = vld [vmem:[%s854 + $0x4] sm:$0x3]
    %v857 = vpack.c.bf16 %v851, %v850
    %v860 = vunpack.c.l.b16 %v855
    %v861 = vunpack.c.l.b16 %v856
    %v862 = vpack.c.b16 %v861, %v860
    %v864 = vsel %vm146, %v857, 0
    %v867 = vsel %vm150, %v862, 0
    %869 = vmatprep.subr.bf16.mxu0 0
    %870 = vmatpush1.bf16.msra.mxu0 %v867
    %871 = vmatprep.subr.bf16.mxu0 0
    %872 = vmatpush1.bf16.msra.mxu0 0
    %873 = vmatprep.subr.bf16.mxu0 0
    %874 = vmatpush1.bf16.msra.mxu0 0
    %875 = vmatprep.subr.bf16.mxu0 0
    %876 = vmatpush1.bf16.msra.mxu0 0
    %877 = vmatprep.subr.bf16.mxu0 0
    %878 = vmatpush1.bf16.msra.mxu0 0
    %879 = vmatprep.subr.bf16.mxu0 0
    %880 = vmatpush1.bf16.msra.mxu0 0
    %881 = vmatprep.subr.bf16.mxu0 0
    %882 = vmatpush1.bf16.msra.mxu0 0
    %883 = vmatprep.subr.bf16.mxu0 0
    %884 = vmatpush1.bf16.msra.mxu0 0
    %885 = vmatprep.subr.bf16.mxu0 0
    %886 = vmatpush1.bf16.msra.mxu0 0
    %887 = vmatprep.subr.bf16.mxu0 0
    %888 = vmatpush1.bf16.msra.mxu0 0
    %889 = vmatprep.subr.bf16.mxu0 0
    %890 = vmatpush1.bf16.msra.mxu0 0
    %891 = vmatprep.subr.bf16.mxu0 0
    %892 = vmatpush1.bf16.msra.mxu0 0
    %893 = vmatprep.subr.bf16.mxu0 0
    %894 = vmatpush1.bf16.msra.mxu0 0
    %895 = vmatprep.subr.bf16.mxu0 0
    %896 = vmatpush1.bf16.msra.mxu0 0
    %897 = vmatprep.subr.bf16.mxu0 0
    %898 = vmatpush1.bf16.msra.mxu0 0
    %899 = vmatprep.subr.bf16.mxu0 0
    %900 = vmatpush1.bf16.msra.mxu0 0
    %901 = vmatprep.mubr.bf16.mxu0 0
    %902 = vmatmul.mubr.bf16.gmra.mrb[0].mxu0 %v864
    %v903 = vpop.f32.mrb[0].mxu0
    %v904 = vadd.f32 0.0, %v903
    %v905 = vpop.f32.mrb[0].mxu0
    %v906 = vpop.f32.mrb[0].mxu0
    %v907 = vadd.f32 0.0, %v906
    %v908 = vpop.f32.mrb[0].mxu0
    %909 = vdwg.mxu0
    %v910 = vunpack.c.l.bf16 %v853
    %v911 = vadd.f32 %v904, %v910
    %v912 = vadd.f32 %v907, %v910
    %vm913 = vcmp.ge.f32.partialorder %v911, 0.0
    %vm914 = vcmp.ge.f32.partialorder %v912, 0.0
    %v915 = vmul.f32 %v911, 0.25
    %v916 = vmul.f32 %v912, 0.25
    %v917 = vsel %vm913, %v911, %v915
    %v918 = vsel %vm914, %v912, %v916
    %v919 = vld [vmem:[#allocation8] sm:$0xf]
    %v920 = vld [vmem:[#allocation8 + $0x4] sm:$0xf]
    %v921 = vld [vmem:[#allocation8 + $0x8] sm:$0xf]
    %v922 = vld [vmem:[#allocation8 + $0xc] sm:$0xf]
    %v923 = vpack.c.bf16 %v918, %v917
    %v924 = vld [vmem:[#allocation9] sm:$0x1]
    %v926 = vlaneseq
    %v927 = vshrl.u32 %v926, 7
    %v928 = vsub.s32 0, %v927
    %v929 = vrot.slane %v924, %v928
    %v935 = vunpack.c.l.b16 %v919
    %v936 = vunpack.c.l.b16 %v920
    %v937 = vunpack.c.l.b16 %v921
    %v938 = vunpack.c.l.b16 %v922
    %v939 = vpack.c.b16 %v936, %v935
    %v940 = vpack.c.b16 %v938, %v937
    %v944 = vsel %vm228, %v923, 0
    %946 = vmatprep.subr.bf16.mxu0 0
    %947 = vmatpush1.bf16.msra.mxu0 %v939
    %948 = vmatprep.subr.bf16.mxu0 0
    %949 = vmatpush1.bf16.msra.mxu0 %v940
    %950 = vmatprep.subr.bf16.mxu0 0
    %951 = vmatpush1.bf16.msra.mxu0 0
    %952 = vmatprep.subr.bf16.mxu0 0
    %953 = vmatpush1.bf16.msra.mxu0 0
    %954 = vmatprep.subr.bf16.mxu0 0
    %955 = vmatpush1.bf16.msra.mxu0 0
    %956 = vmatprep.subr.bf16.mxu0 0
    %957 = vmatpush1.bf16.msra.mxu0 0
    %958 = vmatprep.subr.bf16.mxu0 0
    %959 = vmatpush1.bf16.msra.mxu0 0
    %960 = vmatprep.subr.bf16.mxu0 0
    %961 = vmatpush1.bf16.msra.mxu0 0
    %962 = vmatprep.subr.bf16.mxu0 0
    %963 = vmatpush1.bf16.msra.mxu0 0
    %964 = vmatprep.subr.bf16.mxu0 0
    %965 = vmatpush1.bf16.msra.mxu0 0
    %966 = vmatprep.subr.bf16.mxu0 0
    %967 = vmatpush1.bf16.msra.mxu0 0
    %968 = vmatprep.subr.bf16.mxu0 0
    %969 = vmatpush1.bf16.msra.mxu0 0
    %970 = vmatprep.subr.bf16.mxu0 0
    %971 = vmatpush1.bf16.msra.mxu0 0
    %972 = vmatprep.subr.bf16.mxu0 0
    %973 = vmatpush1.bf16.msra.mxu0 0
    %974 = vmatprep.subr.bf16.mxu0 0
    %975 = vmatpush1.bf16.msra.mxu0 0
    %976 = vmatprep.subr.bf16.mxu0 0
    %977 = vmatpush1.bf16.msra.mxu0 0
    %978 = vmatprep.mubr.bf16.mxu0 0
    %979 = vmatmul.mubr.bf16.gmra.mrb[0].mxu0 %v944
    %v980 = vpop.f32.mrb[0].mxu0
    %v981 = vadd.f32 %v929, %v980
    %v982 = vpop.f32.mrb[0].mxu0
    %v983 = vpop.f32.mrb[0].mxu0
    %v984 = vadd.f32 %v929, %v983
    %v985 = vpop.f32.mrb[0].mxu0
    %986 = vdwg.mxu0
    %vm987 = vcmp.ge.f32.partialorder %v981, 0.0
    %vm988 = vcmp.ge.f32.partialorder %v984, 0.0
    %v989 = vmul.f32 %v981, 0.25
    %v990 = vmul.f32 %v984, 0.25
    %v991 = vsel %vm987, %v981, %v989
    %v992 = vsel %vm988, %v984, %v990
    %v993 = vadd.f32 %v917, %v991
    %v994 = vadd.f32 %v918, %v992
    %v995 = vld [vmem:[%s6] sm:$0xf]
    %v996 = vld [vmem:[%s6 + $0x4] sm:$0xf]
    %v997 = vld [vmem:[%s6 + $0x8] sm:$0xf]
    %v998 = vld [vmem:[%s6 + $0xc] sm:$0xf]
    %v999 = vpack.c.bf16 %v994, %v993
    %v1000 = vld [vmem:[#allocation11] sm:$0x1]
    %v1002 = vlaneseq
    %v1003 = vshrl.u32 %v1002, 7
    %v1004 = vsub.s32 0, %v1003
    %v1005 = vrot.slane %v1000, %v1004
    %v1011 = vunpack.c.l.b16 %v995
    %v1012 = vunpack.c.l.b16 %v996
    %v1013 = vunpack.c.l.b16 %v997
    %v1014 = vunpack.c.l.b16 %v998
    %v1015 = vpack.c.b16 %v1012, %v1011
    %v1016 = vpack.c.b16 %v1014, %v1013
    %v1020 = vsel %vm228, %v999, 0
    %1022 = vmatprep.subr.bf16.mxu0 0
    %1023 = vmatpush1.bf16.msra.mxu0 %v1015
    %1024 = vmatprep.subr.bf16.mxu0 0
    %1025 = vmatpush1.bf16.msra.mxu0 %v1016
    %1026 = vmatprep.subr.bf16.mxu0 0
    %1027 = vmatpush1.bf16.msra.mxu0 0
    %1028 = vmatprep.subr.bf16.mxu0 0
    %1029 = vmatpush1.bf16.msra.mxu0 0
    %1030 = vmatprep.subr.bf16.mxu0 0
    %1031 = vmatpush1.bf16.msra.mxu0 0
    %1032 = vmatprep.subr.bf16.mxu0 0
    %1033 = vmatpush1.bf16.msra.mxu0 0
    %1034 = vmatprep.subr.bf16.mxu0 0
    %1035 = vmatpush1.bf16.msra.mxu0 0
    %1036 = vmatprep.subr.bf16.mxu0 0
    %1037 = vmatpush1.bf16.msra.mxu0 0
    %1038 = vmatprep.subr.bf16.mxu0 0
    %1039 = vmatpush1.bf16.msra.mxu0 0
    %1040 = vmatprep.subr.bf16.mxu0 0
    %1041 = vmatpush1.bf16.msra.mxu0 0
    %1042 = vmatprep.subr.bf16.mxu0 0
    %1043 = vmatpush1.bf16.msra.mxu0 0
    %1044 = vmatprep.subr.bf16.mxu0 0
    %1045 = vmatpush1.bf16.msra.mxu0 0
    %1046 = vmatprep.subr.bf16.mxu0 0
    %1047 = vmatpush1.bf16.msra.mxu0 0
    %1048 = vmatprep.subr.bf16.mxu0 0
    %1049 = vmatpush1.bf16.msra.mxu0 0
    %1050 = vmatprep.subr.bf16.mxu0 0
    %1051 = vmatpush1.bf16.msra.mxu0 0
    %1052 = vmatprep.subr.bf16.mxu0 0
    %1053 = vmatpush1.bf16.msra.mxu0 0
    %1054 = vmatprep.mubr.bf16.mxu0 0
    %1055 = vmatmul.mubr.bf16.gmra.mrb[0].mxu0 %v1020
    %v1056 = vpop.f32.mrb[0].mxu0
    %v1057 = vadd.f32 %v1005, %v1056
    %v1058 = vpop.f32.mrb[0].mxu0
    %v1059 = vpop.f32.mrb[0].mxu0
    %v1060 = vadd.f32 %v1005, %v1059
    %v1061 = vpop.f32.mrb[0].mxu0
    %1062 = vdwg.mxu0
    %1064 = vrot.lane.b32.xlu0 %v1057, 8
    %v1065 = vpop.permute.xlu0 %1064
    %vm1067 = vcmask 97344
    %1068 = vst.msk [vmem:[#allocation14] sm:$0xff] %vm1067, %v1065
    %1070 = vrot.lane.b32.xlu0 %v1060, 8
    %v1071 = vpop.permute.xlu0 %1070
    %1073 = vst.msk [vmem:[#allocation15] sm:$0xff] %vm1067, %v1071
    %1074 = vst.msk [vmem:[#allocation2] sm:$0xff] %vm1067, %v1065
    %1075 = vst.msk [vmem:[#allocation2 + $0x8] sm:$0xff] %vm1067, %v1071
    %v1076 = vld [vmem:[#allocation2] sm:$0xff]
    %v1077 = vld [vmem:[#allocation2 + $0x8] sm:$0xff]
    %s1078 = scalar_lea.vmem %s0, 12
    %v1079 = vld [vmem:[%s1078] sm:$0xf]
    %v1080 = vld [vmem:[%s3] sm:$0xf]
    %v1081 = vld [vmem:[%s3 + $0x4] sm:$0x3]
    %v1082 = vpack.c.bf16 %v1077, %v1076
    %v1085 = vunpack.c.l.b16 %v1080
    %v1086 = vunpack.c.l.b16 %v1081
    %v1087 = vpack.c.b16 %v1086, %v1085
    %v1089 = vsel %vm146, %v1082, 0
    %v1092 = vsel %vm150, %v1087, 0
    %1094 = vmatprep.subr.bf16.mxu0 0
    %1095 = vmatpush1.bf16.msra.mxu0 %v1092
    %1096 = vmatprep.subr.bf16.mxu0 0
    %1097 = vmatpush1.bf16.msra.mxu0 0
    %1098 = vmatprep.subr.bf16.mxu0 0
    %1099 = vmatpush1.bf16.msra.mxu0 0
    %1100 = vmatprep.subr.bf16.mxu0 0
    %1101 = vmatpush1.bf16.msra.mxu0 0
    %1102 = vmatprep.subr.bf16.mxu0 0
    %1103 = vmatpush1.bf16.msra.mxu0 0
    %1104 = vmatprep.subr.bf16.mxu0 0
    %1105 = vmatpush1.bf16.msra.mxu0 0
    %1106 = vmatprep.subr.bf16.mxu0 0
    %1107 = vmatpush1.bf16.msra.mxu0 0
    %1108 = vmatprep.subr.bf16.mxu0 0
    %1109 = vmatpush1.bf16.msra.mxu0 0
    %1110 = vmatprep.subr.bf16.mxu0 0
    %1111 = vmatpush1.bf16.msra.mxu0 0
    %1112 = vmatprep.subr.bf16.mxu0 0
    %1113 = vmatpush1.bf16.msra.mxu0 0
    %1114 = vmatprep.subr.bf16.mxu0 0
    %1115 = vmatpush1.bf16.msra.mxu0 0
    %1116 = vmatprep.subr.bf16.mxu0 0
    %1117 = vmatpush1.bf16.msra.mxu0 0
    %1118 = vmatprep.subr.bf16.mxu0 0
    %1119 = vmatpush1.bf16.msra.mxu0 0
    %1120 = vmatprep.subr.bf16.mxu0 0
    %1121 = vmatpush1.bf16.msra.mxu0 0
    %1122 = vmatprep.subr.bf16.mxu0 0
    %1123 = vmatpush1.bf16.msra.mxu0 0
    %1124 = vmatprep.subr.bf16.mxu0 0
    %1125 = vmatpush1.bf16.msra.mxu0 0
    %1126 = vmatprep.mubr.bf16.mxu0 0
    %1127 = vmatmul.mubr.bf16.gmra.mrb[0].mxu0 %v1089
    %v1128 = vpop.f32.mrb[0].mxu0
    %v1129 = vadd.f32 0.0, %v1128
    %v1130 = vpop.f32.mrb[0].mxu0
    %v1131 = vpop.f32.mrb[0].mxu0
    %v1132 = vadd.f32 0.0, %v1131
    %v1133 = vpop.f32.mrb[0].mxu0
    %1134 = vdwg.mxu0
    %v1135 = vunpack.c.l.bf16 %v1079
    %v1136 = vadd.f32 %v1129, %v1135
    %v1137 = vadd.f32 %v1132, %v1135
    %vm1138 = vcmp.ge.f32.partialorder %v1136, 0.0
    %vm1139 = vcmp.ge.f32.partialorder %v1137, 0.0
    %v1140 = vmul.f32 %v1136, 0.25
    %v1141 = vmul.f32 %v1137, 0.25
    %v1142 = vsel %vm1138, %v1136, %v1140
    %v1143 = vsel %vm1139, %v1137, %v1141
    %v1144 = vld [vmem:[#allocation8] sm:$0xf]
    %v1145 = vld [vmem:[#allocation8 + $0x4] sm:$0xf]
    %v1146 = vld [vmem:[#allocation8 + $0x8] sm:$0xf]
    %v1147 = vld [vmem:[#allocation8 + $0xc] sm:$0xf]
    %v1148 = vpack.c.bf16 %v1143, %v1142
    %v1149 = vld [vmem:[#allocation9] sm:$0x1]
    %v1151 = vlaneseq
    %v1152 = vshrl.u32 %v1151, 7
    %v1153 = vsub.s32 0, %v1152
    %v1154 = vrot.slane %v1149, %v1153
    %v1160 = vunpack.c.l.b16 %v1144
    %v1161 = vunpack.c.l.b16 %v1145
    %v1162 = vunpack.c.l.b16 %v1146
    %v1163 = vunpack.c.l.b16 %v1147
    %v1164 = vpack.c.b16 %v1161, %v1160
    %v1165 = vpack.c.b16 %v1163, %v1162
    %v1169 = vsel %vm228, %v1148, 0
    %1171 = vmatprep.subr.bf16.mxu0 0
    %1172 = vmatpush1.bf16.msra.mxu0 %v1164
    %1173 = vmatprep.subr.bf16.mxu0 0
    %1174 = vmatpush1.bf16.msra.mxu0 %v1165
    %1175 = vmatprep.subr.bf16.mxu0 0
    %1176 = vmatpush1.bf16.msra.mxu0 0
    %1177 = vmatprep.subr.bf16.mxu0 0
    %1178 = vmatpush1.bf16.msra.mxu0 0
    %1179 = vmatprep.subr.bf16.mxu0 0
    %1180 = vmatpush1.bf16.msra.mxu0 0
    %1181 = vmatprep.subr.bf16.mxu0 0
    %1182 = vmatpush1.bf16.msra.mxu0 0
    %1183 = vmatprep.subr.bf16.mxu0 0
    %1184 = vmatpush1.bf16.msra.mxu0 0
    %1185 = vmatprep.subr.bf16.mxu0 0
    %1186 = vmatpush1.bf16.msra.mxu0 0
    %1187 = vmatprep.subr.bf16.mxu0 0
    %1188 = vmatpush1.bf16.msra.mxu0 0
    %1189 = vmatprep.subr.bf16.mxu0 0
    %1190 = vmatpush1.bf16.msra.mxu0 0
    %1191 = vmatprep.subr.bf16.mxu0 0
    %1192 = vmatpush1.bf16.msra.mxu0 0
    %1193 = vmatprep.subr.bf16.mxu0 0
    %1194 = vmatpush1.bf16.msra.mxu0 0
    %1195 = vmatprep.subr.bf16.mxu0 0
    %1196 = vmatpush1.bf16.msra.mxu0 0
    %1197 = vmatprep.subr.bf16.mxu0 0
    %1198 = vmatpush1.bf16.msra.mxu0 0
    %1199 = vmatprep.subr.bf16.mxu0 0
    %1200 = vmatpush1.bf16.msra.mxu0 0
    %1201 = vmatprep.subr.bf16.mxu0 0
    %1202 = vmatpush1.bf16.msra.mxu0 0
    %1203 = vmatprep.mubr.bf16.mxu0 0
    %1204 = vmatmul.mubr.bf16.gmra.mrb[0].mxu0 %v1169
    %v1205 = vpop.f32.mrb[0].mxu0
    %v1206 = vadd.f32 %v1154, %v1205
    %v1207 = vpop.f32.mrb[0].mxu0
    %v1208 = vpop.f32.mrb[0].mxu0
    %v1209 = vadd.f32 %v1154, %v1208
    %v1210 = vpop.f32.mrb[0].mxu0
    %1211 = vdwg.mxu0
    %vm1212 = vcmp.ge.f32.partialorder %v1206, 0.0
    %vm1213 = vcmp.ge.f32.partialorder %v1209, 0.0
    %v1214 = vmul.f32 %v1206, 0.25
    %v1215 = vmul.f32 %v1209, 0.25
    %v1216 = vsel %vm1212, %v1206, %v1214
    %v1217 = vsel %vm1213, %v1209, %v1215
    %v1218 = vadd.f32 %v1142, %v1216
    %v1219 = vadd.f32 %v1143, %v1217
    %v1220 = vld [vmem:[%s6] sm:$0xf]
    %v1221 = vld [vmem:[%s6 + $0x4] sm:$0xf]
    %v1222 = vld [vmem:[%s6 + $0x8] sm:$0xf]
    %v1223 = vld [vmem:[%s6 + $0xc] sm:$0xf]
    %v1224 = vpack.c.bf16 %v1219, %v1218
    %v1225 = vld [vmem:[#allocation11] sm:$0x1]
    %v1227 = vlaneseq
    %v1228 = vshrl.u32 %v1227, 7
    %v1229 = vsub.s32 0, %v1228
    %v1230 = vrot.slane %v1225, %v1229
    %v1236 = vunpack.c.l.b16 %v1220
    %v1237 = vunpack.c.l.b16 %v1221
    %v1238 = vunpack.c.l.b16 %v1222
    %v1239 = vunpack.c.l.b16 %v1223
    %v1240 = vpack.c.b16 %v1237, %v1236
    %v1241 = vpack.c.b16 %v1239, %v1238
    %v1245 = vsel %vm228, %v1224, 0
    %1247 = vmatprep.subr.bf16.mxu0 0
    %1248 = vmatpush1.bf16.msra.mxu0 %v1240
    %1249 = vmatprep.subr.bf16.mxu0 0
    %1250 = vmatpush1.bf16.msra.mxu0 %v1241
    %1251 = vmatprep.subr.bf16.mxu0 0
    %1252 = vmatpush1.bf16.msra.mxu0 0
    %1253 = vmatprep.subr.bf16.mxu0 0
    %1254 = vmatpush1.bf16.msra.mxu0 0
    %1255 = vmatprep.subr.bf16.mxu0 0
    %1256 = vmatpush1.bf16.msra.mxu0 0
    %1257 = vmatprep.subr.bf16.mxu0 0
    %1258 = vmatpush1.bf16.msra.mxu0 0
    %1259 = vmatprep.subr.bf16.mxu0 0
    %1260 = vmatpush1.bf16.msra.mxu0 0
    %1261 = vmatprep.subr.bf16.mxu0 0
    %1262 = vmatpush1.bf16.msra.mxu0 0
    %1263 = vmatprep.subr.bf16.mxu0 0
    %1264 = vmatpush1.bf16.msra.mxu0 0
    %1265 = vmatprep.subr.bf16.mxu0 0
    %1266 = vmatpush1.bf16.msra.mxu0 0
    %1267 = vmatprep.subr.bf16.mxu0 0
    %1268 = vmatpush1.bf16.msra.mxu0 0
    %1269 = vmatprep.subr.bf16.mxu0 0
    %1270 = vmatpush1.bf16.msra.mxu0 0
    %1271 = vmatprep.subr.bf16.mxu0 0
    %1272 = vmatpush1.bf16.msra.mxu0 0
    %1273 = vmatprep.subr.bf16.mxu0 0
    %1274 = vmatpush1.bf16.msra.mxu0 0
    %1275 = vmatprep.subr.bf16.mxu0 0
    %1276 = vmatpush1.bf16.msra.mxu0 0
    %1277 = vmatprep.subr.bf16.mxu0 0
    %1278 = vmatpush1.bf16.msra.mxu0 0
    %1279 = vmatprep.mubr.bf16.mxu0 0
    %1280 = vmatmul.mubr.bf16.gmra.mrb[0].mxu0 %v1245
    %v1281 = vpop.f32.mrb[0].mxu0
    %v1282 = vadd.f32 %v1230, %v1281
    %v1283 = vpop.f32.mrb[0].mxu0
    %v1284 = vpop.f32.mrb[0].mxu0
    %v1285 = vadd.f32 %v1230, %v1284
    %v1286 = vpop.f32.mrb[0].mxu0
    %1287 = vdwg.mxu0
    %1289 = vrot.lane.b32.xlu0 %v1282, 12
    %v1290 = vpop.permute.xlu0 %1289
    %vm1292 = vcmask 130144
    %1293 = vst.msk [vmem:[#allocation14] sm:$0xff] %vm1292, %v1290
    %1295 = vrot.lane.b32.xlu0 %v1285, 12
    %v1296 = vpop.permute.xlu0 %1295
    %1298 = vst.msk [vmem:[#allocation15] sm:$0xff] %vm1292, %v1296
    %1299 = vst.msk [vmem:[#allocation2] sm:$0xff] %vm349, %v1282
    %1300 = vst.msk [vmem:[#allocation2 + $0x8] sm:$0xff] %vm349, %v1285
    %v1301 = vld [vmem:[#allocation2 + $0x8] sm:$0xff]
    %v1302 = vld [vmem:[#allocation12] sm:$0xf]
    %v1303 = vld [vmem:[#allocation12 + $0x4] sm:$0x3]
    %v1304 = vpack.c.bf16 %v1301, %v1301
    %v1305 = vld [vmem:[%s9] sm:$0x1]
    %v1307 = vlaneseq
    %v1308 = vshrl.u32 %v1307, 7
    %v1309 = vsub.s32 0, %v1308
    %v1310 = vrot.slane %v1305, %v1309
    %v1314 = vunpack.c.l.b16 %v1302
    %v1315 = vunpack.c.l.b16 %v1303
    %v1316 = vpack.c.b16 %v1315, %v1314
    %v1318 = vsel %vm146, %v1304, 0
    %v1321 = vsel %vm150, %v1316, 0
    %1323 = vmatprep.subr.bf16.mxu0 0
    %1324 = vmatpush1.bf16.msra.mxu0 %v1321
    %1325 = vmatprep.subr.bf16.mxu0 0
    %1326 = vmatpush1.bf16.msra.mxu0 0
    %1327 = vmatprep.subr.bf16.mxu0 0
    %1328 = vmatpush1.bf16.msra.mxu0 0
    %1329 = vmatprep.subr.bf16.mxu0 0
    %1330 = vmatpush1.bf16.msra.mxu0 0
    %1331 = vmatprep.subr.bf16.mxu0 0
    %1332 = vmatpush1.bf16.msra.mxu0 0
    %1333 = vmatprep.subr.bf16.mxu0 0
    %1334 = vmatpush1.bf16.msra.mxu0 0
    %1335 = vmatprep.subr.bf16.mxu0 0
    %1336 = vmatpush1.bf16.msra.mxu0 0
    %1337 = vmatprep.subr.bf16.mxu0 0
    %1338 = vmatpush1.bf16.msra.mxu0 0
    %1339 = vmatprep.subr.bf16.mxu0 0
    %1340 = vmatpush1.bf16.msra.mxu0 0
    %1341 = vmatprep.subr.bf16.mxu0 0
    %1342 = vmatpush1.bf16.msra.mxu0 0
    %1343 = vmatprep.subr.bf16.mxu0 0
    %1344 = vmatpush1.bf16.msra.mxu0 0
    %1345 = vmatprep.subr.bf16.mxu0 0
    %1346 = vmatpush1.bf16.msra.mxu0 0
    %1347 = vmatprep.subr.bf16.mxu0 0
    %1348 = vmatpush1.bf16.msra.mxu0 0
    %1349 = vmatprep.subr.bf16.mxu0 0
    %1350 = vmatpush1.bf16.msra.mxu0 0
    %1351 = vmatprep.subr.bf16.mxu0 0
    %1352 = vmatpush1.bf16.msra.mxu0 0
    %1353 = vmatprep.subr.bf16.mxu0 0
    %1354 = vmatpush1.bf16.msra.mxu0 0
    %1355 = vmatprep.mubr.bf16.mxu0 0
    %1356 = vmatmul.mubr.bf16.gmra.mrb[0].mxu0 %v1318
    %v1357 = vpop.f32.mrb[0].mxu0
    %v1358 = vadd.f32 %v1310, %v1357
    %v1359 = vpop.f32.mrb[0].mxu0
    %v1360 = vpop.f32.mrb[0].mxu0
    %v1361 = vpop.f32.mrb[0].mxu0
    %1362 = vdwg.mxu0
    %vm1363 = vcmp.ge.f32.partialorder %v1358, 0.0
    %v1364 = vmul.f32 %v1358, 0.25
    %v1365 = vsel %vm1363, %v1358, %v1364
    %v1366 = vld [vmem:[%s10] sm:$0xf]
    %v1367 = vld [vmem:[%s10 + $0x4] sm:$0xf]
    %v1368 = vld [vmem:[%s10 + $0x8] sm:$0xf]
    %v1369 = vld [vmem:[%s10 + $0xc] sm:$0xf]
    %v1370 = vld [vmem:[%s10 + $0x10] sm:$0xf]
    %v1371 = vld [vmem:[%s10 + $0x14] sm:$0xf]
    %v1372 = vld [vmem:[%s10 + $0x18] sm:$0xf]
    %v1373 = vld [vmem:[%s10 + $0x1c] sm:$0xf]
    %v1374 = vld [vmem:[%s10 + $0x20] sm:$0xf]
    %v1375 = vld [vmem:[%s10 + $0x24] sm:$0xf]
    %v1376 = vld [vmem:[%s10 + $0x28] sm:$0xf]
    %v1377 = vld [vmem:[%s10 + $0x2c] sm:$0xf]
    %v1378 = vpack.c.bf16 %v1365, %v1365
    %v1379 = vld [vmem:[%s11] sm:$0x1]
    %v1381 = vlaneseq
    %v1382 = vshrl.u32 %v1381, 7
    %v1383 = vsub.s32 0, %v1382
    %v1384 = vrot.slane %v1379, %v1383
    %v1398 = vunpack.c.l.b16 %v1366
    %v1399 = vunpack.c.l.b16 %v1367
    %v1400 = vunpack.c.l.b16 %v1368
    %v1401 = vunpack.c.l.b16 %v1369
    %v1402 = vunpack.c.l.b16 %v1370
    %v1403 = vunpack.c.l.b16 %v1371
    %v1404 = vunpack.c.l.b16 %v1372
    %v1405 = vunpack.c.l.b16 %v1373
    %v1406 = vunpack.c.l.b16 %v1374
    %v1407 = vunpack.c.l.b16 %v1375
    %v1408 = vunpack.c.l.b16 %v1376
    %v1409 = vunpack.c.l.b16 %v1377
    %v1410 = vpack.c.b16 %v1399, %v1398
    %v1411 = vpack.c.b16 %v1401, %v1400
    %v1412 = vpack.c.b16 %v1403, %v1402
    %v1413 = vpack.c.b16 %v1405, %v1404
    %v1414 = vpack.c.b16 %v1407, %v1406
    %v1415 = vpack.c.b16 %v1409, %v1408
    %v1423 = vsel %vm475, %v1378, 0
    %1425 = vmatprep.subr.bf16.mxu0 0
    %1426 = vmatpush1.bf16.msra.mxu0 %v1410
    %1427 = vmatprep.subr.bf16.mxu0 0
    %1428 = vmatpush1.bf16.msra.mxu0 %v1411
    %1429 = vmatprep.subr.bf16.mxu0 0
    %1430 = vmatpush1.bf16.msra.mxu0 %v1412
    %1431 = vmatprep.subr.bf16.mxu0 0
    %1432 = vmatpush1.bf16.msra.mxu0 %v1413
    %1433 = vmatprep.subr.bf16.mxu0 0
    %1434 = vmatpush1.bf16.msra.mxu0 %v1414
    %1435 = vmatprep.subr.bf16.mxu0 0
    %1436 = vmatpush1.bf16.msra.mxu0 %v1415
    %1437 = vmatprep.subr.bf16.mxu0 0
    %1438 = vmatpush1.bf16.msra.mxu0 0
    %1439 = vmatprep.subr.bf16.mxu0 0
    %1440 = vmatpush1.bf16.msra.mxu0 0
    %1441 = vmatprep.subr.bf16.mxu0 0
    %1442 = vmatpush1.bf16.msra.mxu0 0
    %1443 = vmatprep.subr.bf16.mxu0 0
    %1444 = vmatpush1.bf16.msra.mxu0 0
    %1445 = vmatprep.subr.bf16.mxu0 0
    %1446 = vmatpush1.bf16.msra.mxu0 0
    %1447 = vmatprep.subr.bf16.mxu0 0
    %1448 = vmatpush1.bf16.msra.mxu0 0
    %1449 = vmatprep.subr.bf16.mxu0 0
    %1450 = vmatpush1.bf16.msra.mxu0 0
    %1451 = vmatprep.subr.bf16.mxu0 0
    %1452 = vmatpush1.bf16.msra.mxu0 0
    %1453 = vmatprep.subr.bf16.mxu0 0
    %1454 = vmatpush1.bf16.msra.mxu0 0
    %1455 = vmatprep.subr.bf16.mxu0 0
    %1456 = vmatpush1.bf16.msra.mxu0 0
    %1457 = vmatprep.mubr.bf16.mxu0 0
    %1458 = vmatmul.mubr.bf16.gmra.mrb[0].mxu0 %v1423
    %v1459 = vpop.f32.mrb[0].mxu0
    %v1460 = vadd.f32 %v1384, %v1459
    %v1461 = vpop.f32.mrb[0].mxu0
    %v1462 = vpop.f32.mrb[0].mxu0
    %v1463 = vpop.f32.mrb[0].mxu0
    %1464 = vdwg.mxu0
    %vm1465 = vcmp.ge.f32.partialorder %v1460, 0.0
    %v1466 = vmul.f32 %v1460, 0.25
    %v1467 = vsel %vm1465, %v1460, %v1466
    %v1468 = vadd.f32 %v1365, %v1467
    %v1469 = vld [vmem:[%s12] sm:$0xf]
    %v1470 = vld [vmem:[%s12 + $0x4] sm:$0xf]
    %v1471 = vld [vmem:[%s12 + $0x8] sm:$0xf]
    %v1472 = vld [vmem:[%s12 + $0xc] sm:$0xf]
    %v1473 = vld [vmem:[%s12 + $0x10] sm:$0xf]
    %v1474 = vld [vmem:[%s12 + $0x14] sm:$0xf]
    %v1475 = vld [vmem:[%s12 + $0x18] sm:$0xf]
    %v1476 = vld [vmem:[%s12 + $0x1c] sm:$0xf]
    %v1477 = vld [vmem:[%s12 + $0x20] sm:$0xf]
    %v1478 = vld [vmem:[%s12 + $0x24] sm:$0xf]
    %v1479 = vld [vmem:[%s12 + $0x28] sm:$0xf]
    %v1480 = vld [vmem:[%s12 + $0x2c] sm:$0xf]
    %v1481 = vpack.c.bf16 %v1468, %v1468
    %v1482 = vld [vmem:[%s13] sm:$0x1]
    %v1484 = vlaneseq
    %v1485 = vshrl.u32 %v1484, 7
    %v1486 = vsub.s32 0, %v1485
    %v1487 = vrot.slane %v1482, %v1486
    %v1501 = vunpack.c.l.b16 %v1469
    %v1502 = vunpack.c.l.b16 %v1470
    %v1503 = vunpack.c.l.b16 %v1471
    %v1504 = vunpack.c.l.b16 %v1472
    %v1505 = vunpack.c.l.b16 %v1473
    %v1506 = vunpack.c.l.b16 %v1474
    %v1507 = vunpack.c.l.b16 %v1475
    %v1508 = vunpack.c.l.b16 %v1476
    %v1509 = vunpack.c.l.b16 %v1477
    %v1510 = vunpack.c.l.b16 %v1478
    %v1511 = vunpack.c.l.b16 %v1479
    %v1512 = vunpack.c.l.b16 %v1480
    %v1513 = vpack.c.b16 %v1502, %v1501
    %v1514 = vpack.c.b16 %v1504, %v1503
    %v1515 = vpack.c.b16 %v1506, %v1505
    %v1516 = vpack.c.b16 %v1508, %v1507
    %v1517 = vpack.c.b16 %v1510, %v1509
    %v1518 = vpack.c.b16 %v1512, %v1511
    %v1526 = vsel %vm475, %v1481, 0
    %1528 = vmatprep.subr.bf16.mxu0 0
    %1529 = vmatpush1.bf16.msra.mxu0 %v1513
    %1530 = vmatprep.subr.bf16.mxu0 0
    %1531 = vmatpush1.bf16.msra.mxu0 %v1514
    %1532 = vmatprep.subr.bf16.mxu0 0
    %1533 = vmatpush1.bf16.msra.mxu0 %v1515
    %1534 = vmatprep.subr.bf16.mxu0 0
    %1535 = vmatpush1.bf16.msra.mxu0 %v1516
    %1536 = vmatprep.subr.bf16.mxu0 0
    %1537 = vmatpush1.bf16.msra.mxu0 %v1517
    %1538 = vmatprep.subr.bf16.mxu0 0
    %1539 = vmatpush1.bf16.msra.mxu0 %v1518
    %1540 = vmatprep.subr.bf16.mxu0 0
    %1541 = vmatpush1.bf16.msra.mxu0 0
    %1542 = vmatprep.subr.bf16.mxu0 0
    %1543 = vmatpush1.bf16.msra.mxu0 0
    %1544 = vmatprep.subr.bf16.mxu0 0
    %1545 = vmatpush1.bf16.msra.mxu0 0
    %1546 = vmatprep.subr.bf16.mxu0 0
    %1547 = vmatpush1.bf16.msra.mxu0 0
    %1548 = vmatprep.subr.bf16.mxu0 0
    %1549 = vmatpush1.bf16.msra.mxu0 0
    %1550 = vmatprep.subr.bf16.mxu0 0
    %1551 = vmatpush1.bf16.msra.mxu0 0
    %1552 = vmatprep.subr.bf16.mxu0 0
    %1553 = vmatpush1.bf16.msra.mxu0 0
    %1554 = vmatprep.subr.bf16.mxu0 0
    %1555 = vmatpush1.bf16.msra.mxu0 0
    %1556 = vmatprep.subr.bf16.mxu0 0
    %1557 = vmatpush1.bf16.msra.mxu0 0
    %1558 = vmatprep.subr.bf16.mxu0 0
    %1559 = vmatpush1.bf16.msra.mxu0 0
    %1560 = vmatprep.mubr.bf16.mxu0 0
    %1561 = vmatmul.mubr.bf16.gmra.mrb[0].mxu0 %v1526
    %v1562 = vpop.f32.mrb[0].mxu0
    %v1563 = vadd.f32 %v1487, %v1562
    %v1564 = vpop.f32.mrb[0].mxu0
    %v1565 = vpop.f32.mrb[0].mxu0
    %v1566 = vpop.f32.mrb[0].mxu0
    %1567 = vdwg.mxu0
    %v1568 = vadd.f32 %v1301, %v1563
    %1569 = vst.msk [vmem:[#allocation2 + $0x8] sm:$0xff] %vm146, %v1568
    %v1570 = vld [vmem:[#allocation2] sm:$0xff]
    %v1571 = vld [vmem:[#allocation2 + $0x8] sm:$0xff]
    %s1572 = scalar_lea.vmem %s0, 16
    %v1573 = vld [vmem:[%s1572] sm:$0xf]
    %v1574 = vld [vmem:[%s628] sm:$0xf]
    %v1575 = vld [vmem:[%s628 + $0x4] sm:$0x3]
    %v1576 = vpack.c.bf16 %v1571, %v1570
    %v1579 = vunpack.c.l.b16 %v1574
    %v1580 = vunpack.c.l.b16 %v1575
    %v1581 = vpack.c.b16 %v1580, %v1579
    %v1583 = vsel %vm146, %v1576, 0
    %v1586 = vsel %vm150, %v1581, 0
    %1588 = vmatprep.subr.bf16.mxu0 0
    %1589 = vmatpush1.bf16.msra.mxu0 %v1586
    %1590 = vmatprep.subr.bf16.mxu0 0
    %1591 = vmatpush1.bf16.msra.mxu0 0
    %1592 = vmatprep.subr.bf16.mxu0 0
    %1593 = vmatpush1.bf16.msra.mxu0 0
    %1594 = vmatprep.subr.bf16.mxu0 0
    %1595 = vmatpush1.bf16.msra.mxu0 0
    %1596 = vmatprep.subr.bf16.mxu0 0
    %1597 = vmatpush1.bf16.msra.mxu0 0
    %1598 = vmatprep.subr.bf16.mxu0 0
    %1599 = vmatpush1.bf16.msra.mxu0 0
    %1600 = vmatprep.subr.bf16.mxu0 0
    %1601 = vmatpush1.bf16.msra.mxu0 0
    %1602 = vmatprep.subr.bf16.mxu0 0
    %1603 = vmatpush1.bf16.msra.mxu0 0
    %1604 = vmatprep.subr.bf16.mxu0 0
    %1605 = vmatpush1.bf16.msra.mxu0 0
    %1606 = vmatprep.subr.bf16.mxu0 0
    %1607 = vmatpush1.bf16.msra.mxu0 0
    %1608 = vmatprep.subr.bf16.mxu0 0
    %1609 = vmatpush1.bf16.msra.mxu0 0
    %1610 = vmatprep.subr.bf16.mxu0 0
    %1611 = vmatpush1.bf16.msra.mxu0 0
    %1612 = vmatprep.subr.bf16.mxu0 0
    %1613 = vmatpush1.bf16.msra.mxu0 0
    %1614 = vmatprep.subr.bf16.mxu0 0
    %1615 = vmatpush1.bf16.msra.mxu0 0
    %1616 = vmatprep.subr.bf16.mxu0 0
    %1617 = vmatpush1.bf16.msra.mxu0 0
    %1618 = vmatprep.subr.bf16.mxu0 0
    %1619 = vmatpush1.bf16.msra.mxu0 0
    %1620 = vmatprep.mubr.bf16.mxu0 0
    %1621 = vmatmul.mubr.bf16.gmra.mrb[0].mxu0 %v1583
    %v1622 = vpop.f32.mrb[0].mxu0
    %v1623 = vadd.f32 0.0, %v1622
    %v1624 = vpop.f32.mrb[0].mxu0
    %v1625 = vpop.f32.mrb[0].mxu0
    %v1626 = vadd.f32 0.0, %v1625
    %v1627 = vpop.f32.mrb[0].mxu0
    %1628 = vdwg.mxu0
    %v1629 = vunpack.c.l.bf16 %v1573
    %v1630 = vadd.f32 %v1623, %v1629
    %v1631 = vadd.f32 %v1626, %v1629
    %vm1632 = vcmp.ge.f32.partialorder %v1630, 0.0
    %vm1633 = vcmp.ge.f32.partialorder %v1631, 0.0
    %v1634 = vmul.f32 %v1630, 0.25
    %v1635 = vmul.f32 %v1631, 0.25
    %v1636 = vsel %vm1632, %v1630, %v1634
    %v1637 = vsel %vm1633, %v1631, %v1635
    %v1638 = vld [vmem:[#allocation8] sm:$0xf]
    %v1639 = vld [vmem:[#allocation8 + $0x4] sm:$0xf]
    %v1640 = vld [vmem:[#allocation8 + $0x8] sm:$0xf]
    %v1641 = vld [vmem:[#allocation8 + $0xc] sm:$0xf]
    %v1642 = vpack.c.bf16 %v1637, %v1636
    %v1643 = vld [vmem:[#allocation9] sm:$0x1]
    %v1645 = vlaneseq
    %v1646 = vshrl.u32 %v1645, 7
    %v1647 = vsub.s32 0, %v1646
    %v1648 = vrot.slane %v1643, %v1647
    %v1654 = vunpack.c.l.b16 %v1638
    %v1655 = vunpack.c.l.b16 %v1639
    %v1656 = vunpack.c.l.b16 %v1640
    %v1657 = vunpack.c.l.b16 %v1641
    %v1658 = vpack.c.b16 %v1655, %v1654
    %v1659 = vpack.c.b16 %v1657, %v1656
    %v1663 = vsel %vm228, %v1642, 0
    %1665 = vmatprep.subr.bf16.mxu0 0
    %1666 = vmatpush1.bf16.msra.mxu0 %v1658
    %1667 = vmatprep.subr.bf16.mxu0 0
    %1668 = vmatpush1.bf16.msra.mxu0 %v1659
    %1669 = vmatprep.subr.bf16.mxu0 0
    %1670 = vmatpush1.bf16.msra.mxu0 0
    %1671 = vmatprep.subr.bf16.mxu0 0
    %1672 = vmatpush1.bf16.msra.mxu0 0
    %1673 = vmatprep.subr.bf16.mxu0 0
    %1674 = vmatpush1.bf16.msra.mxu0 0
    %1675 = vmatprep.subr.bf16.mxu0 0
    %1676 = vmatpush1.bf16.msra.mxu0 0
    %1677 = vmatprep.subr.bf16.mxu0 0
    %1678 = vmatpush1.bf16.msra.mxu0 0
    %1679 = vmatprep.subr.bf16.mxu0 0
    %1680 = vmatpush1.bf16.msra.mxu0 0
    %1681 = vmatprep.subr.bf16.mxu0 0
    %1682 = vmatpush1.bf16.msra.mxu0 0
    %1683 = vmatprep.subr.bf16.mxu0 0
    %1684 = vmatpush1.bf16.msra.mxu0 0
    %1685 = vmatprep.subr.bf16.mxu0 0
    %1686 = vmatpush1.bf16.msra.mxu0 0
    %1687 = vmatprep.subr.bf16.mxu0 0
    %1688 = vmatpush1.bf16.msra.mxu0 0
    %1689 = vmatprep.subr.bf16.mxu0 0
    %1690 = vmatpush1.bf16.msra.mxu0 0
    %1691 = vmatprep.subr.bf16.mxu0 0
    %1692 = vmatpush1.bf16.msra.mxu0 0
    %1693 = vmatprep.subr.bf16.mxu0 0
    %1694 = vmatpush1.bf16.msra.mxu0 0
    %1695 = vmatprep.subr.bf16.mxu0 0
    %1696 = vmatpush1.bf16.msra.mxu0 0
    %1697 = vmatprep.mubr.bf16.mxu0 0
    %1698 = vmatmul.mubr.bf16.gmra.mrb[0].mxu0 %v1663
    %v1699 = vpop.f32.mrb[0].mxu0
    %v1700 = vadd.f32 %v1648, %v1699
    %v1701 = vpop.f32.mrb[0].mxu0
    %v1702 = vpop.f32.mrb[0].mxu0
    %v1703 = vadd.f32 %v1648, %v1702
    %v1704 = vpop.f32.mrb[0].mxu0
    %1705 = vdwg.mxu0
    %vm1706 = vcmp.ge.f32.partialorder %v1700, 0.0
    %vm1707 = vcmp.ge.f32.partialorder %v1703, 0.0
    %v1708 = vmul.f32 %v1700, 0.25
    %v1709 = vmul.f32 %v1703, 0.25
    %v1710 = vsel %vm1706, %v1700, %v1708
    %v1711 = vsel %vm1707, %v1703, %v1709
    %v1712 = vadd.f32 %v1636, %v1710
    %v1713 = vadd.f32 %v1637, %v1711
    %v1714 = vld [vmem:[%s6] sm:$0xf]
    %v1715 = vld [vmem:[%s6 + $0x4] sm:$0xf]
    %v1716 = vld [vmem:[%s6 + $0x8] sm:$0xf]
    %v1717 = vld [vmem:[%s6 + $0xc] sm:$0xf]
    %v1718 = vpack.c.bf16 %v1713, %v1712
    %v1719 = vld [vmem:[#allocation11] sm:$0x1]
    %v1721 = vlaneseq
    %v1722 = vshrl.u32 %v1721, 7
    %v1723 = vsub.s32 0, %v1722
    %v1724 = vrot.slane %v1719, %v1723
    %v1730 = vunpack.c.l.b16 %v1714
    %v1731 = vunpack.c.l.b16 %v1715
    %v1732 = vunpack.c.l.b16 %v1716
    %v1733 = vunpack.c.l.b16 %v1717
    %v1734 = vpack.c.b16 %v1731, %v1730
    %v1735 = vpack.c.b16 %v1733, %v1732
    %v1739 = vsel %vm228, %v1718, 0
    %1741 = vmatprep.subr.bf16.mxu0 0
    %1742 = vmatpush1.bf16.msra.mxu0 %v1734
    %1743 = vmatprep.subr.bf16.mxu0 0
    %1744 = vmatpush1.bf16.msra.mxu0 %v1735
    %1745 = vmatprep.subr.bf16.mxu0 0
    %1746 = vmatpush1.bf16.msra.mxu0 0
    %1747 = vmatprep.subr.bf16.mxu0 0
    %1748 = vmatpush1.bf16.msra.mxu0 0
    %1749 = vmatprep.subr.bf16.mxu0 0
    %1750 = vmatpush1.bf16.msra.mxu0 0
    %1751 = vmatprep.subr.bf16.mxu0 0
    %1752 = vmatpush1.bf16.msra.mxu0 0
    %1753 = vmatprep.subr.bf16.mxu0 0
    %1754 = vmatpush1.bf16.msra.mxu0 0
    %1755 = vmatprep.subr.bf16.mxu0 0
    %1756 = vmatpush1.bf16.msra.mxu0 0
    %1757 = vmatprep.subr.bf16.mxu0 0
    %1758 = vmatpush1.bf16.msra.mxu0 0
    %1759 = vmatprep.subr.bf16.mxu0 0
    %1760 = vmatpush1.bf16.msra.mxu0 0
    %1761 = vmatprep.subr.bf16.mxu0 0
    %1762 = vmatpush1.bf16.msra.mxu0 0
    %1763 = vmatprep.subr.bf16.mxu0 0
    %1764 = vmatpush1.bf16.msra.mxu0 0
    %1765 = vmatprep.subr.bf16.mxu0 0
    %1766 = vmatpush1.bf16.msra.mxu0 0
    %1767 = vmatprep.subr.bf16.mxu0 0
    %1768 = vmatpush1.bf16.msra.mxu0 0
    %1769 = vmatprep.subr.bf16.mxu0 0
    %1770 = vmatpush1.bf16.msra.mxu0 0
    %1771 = vmatprep.subr.bf16.mxu0 0
    %1772 = vmatpush1.bf16.msra.mxu0 0
    %1773 = vmatprep.mubr.bf16.mxu0 0
    %1774 = vmatmul.mubr.bf16.gmra.mrb[0].mxu0 %v1739
    %v1775 = vpop.f32.mrb[0].mxu0
    %v1776 = vadd.f32 %v1724, %v1775
    %v1777 = vpop.f32.mrb[0].mxu0
    %v1778 = vpop.f32.mrb[0].mxu0
    %v1779 = vadd.f32 %v1724, %v1778
    %v1780 = vpop.f32.mrb[0].mxu0
    %1781 = vdwg.mxu0
    %1783 = vrot.lane.b32.xlu0 %v1776, 16
    %v1784 = vpop.permute.xlu0 %1783
    %vm1786 = vcmask 162944
    %1787 = vst.msk [vmem:[#allocation14] sm:$0xff] %vm1786, %v1784
    %1789 = vrot.lane.b32.xlu0 %v1779, 16
    %v1790 = vpop.permute.xlu0 %1789
    %1792 = vst.msk [vmem:[#allocation15] sm:$0xff] %vm1786, %v1790
    %1793 = vrot.lane.b32.xlu0 %v1776, 4
    %v1794 = vpop.permute.xlu0 %1793
    %1795 = vrot.lane.b32.xlu0 %v1779, 4
    %v1796 = vpop.permute.xlu0 %1795
    %1799 = vst.msk [vmem:[#allocation2] sm:$0xff] %vm841, %v1794
    %1800 = vst.msk [vmem:[#allocation2 + $0x8] sm:$0xff] %vm841, %v1796
    %v1801 = vld [vmem:[#allocation2] sm:$0xff]
    %v1802 = vld [vmem:[#allocation2 + $0x8] sm:$0xff]
    %s1803 = scalar_lea.vmem %s0, 20
    %v1804 = vld [vmem:[%s1803] sm:$0xf]
    %v1805 = vld [vmem:[%s854] sm:$0xf]
    %v1806 = vld [vmem:[%s854 + $0x4] sm:$0x3]
    %v1807 = vpack.c.bf16 %v1802, %v1801
    %v1810 = vunpack.c.l.b16 %v1805
    %v1811 = vunpack.c.l.b16 %v1806
    %v1812 = vpack.c.b16 %v1811, %v1810
    %v1814 = vsel %vm146, %v1807, 0
    %v1817 = vsel %vm150, %v1812, 0
    %1819 = vmatprep.subr.bf16.mxu0 0
    %1820 = vmatpush1.bf16.msra.mxu0 %v1817
    %1821 = vmatprep.subr.bf16.mxu0 0
    %1822 = vmatpush1.bf16.msra.mxu0 0
    %1823 = vmatprep.subr.bf16.mxu0 0
    %1824 = vmatpush1.bf16.msra.mxu0 0
    %1825 = vmatprep.subr.bf16.mxu0 0
    %1826 = vmatpush1.bf16.msra.mxu0 0
    %1827 = vmatprep.subr.bf16.mxu0 0
    %1828 = vmatpush1.bf16.msra.mxu0 0
    %1829 = vmatprep.subr.bf16.mxu0 0
    %1830 = vmatpush1.bf16.msra.mxu0 0
    %1831 = vmatprep.subr.bf16.mxu0 0
    %1832 = vmatpush1.bf16.msra.mxu0 0
    %1833 = vmatprep.subr.bf16.mxu0 0
    %1834 = vmatpush1.bf16.msra.mxu0 0
    %1835 = vmatprep.subr.bf16.mxu0 0
    %1836 = vmatpush1.bf16.msra.mxu0 0
    %1837 = vmatprep.subr.bf16.mxu0 0
    %1838 = vmatpush1.bf16.msra.mxu0 0
    %1839 = vmatprep.subr.bf16.mxu0 0
    %1840 = vmatpush1.bf16.msra.mxu0 0
    %1841 = vmatprep.subr.bf16.mxu0 0
    %1842 = vmatpush1.bf16.msra.mxu0 0
    %1843 = vmatprep.subr.bf16.mxu0 0
    %1844 = vmatpush1.bf16.msra.mxu0 0
    %1845 = vmatprep.subr.bf16.mxu0 0
    %1846 = vmatpush1.bf16.msra.mxu0 0
    %1847 = vmatprep.subr.bf16.mxu0 0
    %1848 = vmatpush1.bf16.msra.mxu0 0
    %1849 = vmatprep.subr.bf16.mxu0 0
    %1850 = vmatpush1.bf16.msra.mxu0 0
    %1851 = vmatprep.mubr.bf16.mxu0 0
    %1852 = vmatmul.mubr.bf16.gmra.mrb[0].mxu0 %v1814
    %v1853 = vpop.f32.mrb[0].mxu0
    %v1854 = vadd.f32 0.0, %v1853
    %v1855 = vpop.f32.mrb[0].mxu0
    %v1856 = vpop.f32.mrb[0].mxu0
    %v1857 = vadd.f32 0.0, %v1856
    %v1858 = vpop.f32.mrb[0].mxu0
    %1859 = vdwg.mxu0
    %v1860 = vunpack.c.l.bf16 %v1804
    %v1861 = vadd.f32 %v1854, %v1860
    %v1862 = vadd.f32 %v1857, %v1860
    %vm1863 = vcmp.ge.f32.partialorder %v1861, 0.0
    %vm1864 = vcmp.ge.f32.partialorder %v1862, 0.0
    %v1865 = vmul.f32 %v1861, 0.25
    %v1866 = vmul.f32 %v1862, 0.25
    %v1867 = vsel %vm1863, %v1861, %v1865
    %v1868 = vsel %vm1864, %v1862, %v1866
    %v1869 = vld [vmem:[#allocation8] sm:$0xf]
    %v1870 = vld [vmem:[#allocation8 + $0x4] sm:$0xf]
    %v1871 = vld [vmem:[#allocation8 + $0x8] sm:$0xf]
    %v1872 = vld [vmem:[#allocation8 + $0xc] sm:$0xf]
    %v1873 = vpack.c.bf16 %v1868, %v1867
    %v1874 = vld [vmem:[#allocation9] sm:$0x1]
    %v1876 = vlaneseq
    %v1877 = vshrl.u32 %v1876, 7
    %v1878 = vsub.s32 0, %v1877
    %v1879 = vrot.slane %v1874, %v1878
    %v1885 = vunpack.c.l.b16 %v1869
    %v1886 = vunpack.c.l.b16 %v1870
    %v1887 = vunpack.c.l.b16 %v1871
    %v1888 = vunpack.c.l.b16 %v1872
    %v1889 = vpack.c.b16 %v1886, %v1885
    %v1890 = vpack.c.b16 %v1888, %v1887
    %v1894 = vsel %vm228, %v1873, 0
    %1896 = vmatprep.subr.bf16.mxu0 0
    %1897 = vmatpush1.bf16.msra.mxu0 %v1889
    %1898 = vmatprep.subr.bf16.mxu0 0
    %1899 = vmatpush1.bf16.msra.mxu0 %v1890
    %1900 = vmatprep.subr.bf16.mxu0 0
    %1901 = vmatpush1.bf16.msra.mxu0 0
    %1902 = vmatprep.subr.bf16.mxu0 0
    %1903 = vmatpush1.bf16.msra.mxu0 0
    %1904 = vmatprep.subr.bf16.mxu0 0
    %1905 = vmatpush1.bf16.msra.mxu0 0
    %1906 = vmatprep.subr.bf16.mxu0 0
    %1907 = vmatpush1.bf16.msra.mxu0 0
    %1908 = vmatprep.subr.bf16.mxu0 0
    %1909 = vmatpush1.bf16.msra.mxu0 0
    %1910 = vmatprep.subr.bf16.mxu0 0
    %1911 = vmatpush1.bf16.msra.mxu0 0
    %1912 = vmatprep.subr.bf16.mxu0 0
    %1913 = vmatpush1.bf16.msra.mxu0 0
    %1914 = vmatprep.subr.bf16.mxu0 0
    %1915 = vmatpush1.bf16.msra.mxu0 0
    %1916 = vmatprep.subr.bf16.mxu0 0
    %1917 = vmatpush1.bf16.msra.mxu0 0
    %1918 = vmatprep.subr.bf16.mxu0 0
    %1919 = vmatpush1.bf16.msra.mxu0 0
    %1920 = vmatprep.subr.bf16.mxu0 0
    %1921 = vmatpush1.bf16.msra.mxu0 0
    %1922 = vmatprep.subr.bf16.mxu0 0
    %1923 = vmatpush1.bf16.msra.mxu0 0
    %1924 = vmatprep.subr.bf16.mxu0 0
    %1925 = vmatpush1.bf16.msra.mxu0 0
    %1926 = vmatprep.subr.bf16.mxu0 0
    %1927 = vmatpush1.bf16.msra.mxu0 0
    %1928 = vmatprep.mubr.bf16.mxu0 0
    %1929 = vmatmul.mubr.bf16.gmra.mrb[0].mxu0 %v1894
    %v1930 = vpop.f32.mrb[0].mxu0
    %v1931 = vadd.f32 %v1879, %v1930
    %v1932 = vpop.f32.mrb[0].mxu0
    %v1933 = vpop.f32.mrb[0].mxu0
    %v1934 = vadd.f32 %v1879, %v1933
    %v1935 = vpop.f32.mrb[0].mxu0
    %1936 = vdwg.mxu0
    %vm1937 = vcmp.ge.f32.partialorder %v1931, 0.0
    %vm1938 = vcmp.ge.f32.partialorder %v1934, 0.0
    %v1939 = vmul.f32 %v1931, 0.25
    %v1940 = vmul.f32 %v1934, 0.25
    %v1941 = vsel %vm1937, %v1931, %v1939
    %v1942 = vsel %vm1938, %v1934, %v1940
    %v1943 = vadd.f32 %v1867, %v1941
    %v1944 = vadd.f32 %v1868, %v1942
    %v1945 = vld [vmem:[%s6] sm:$0xf]
    %v1946 = vld [vmem:[%s6 + $0x4] sm:$0xf]
    %v1947 = vld [vmem:[%s6 + $0x8] sm:$0xf]
    %v1948 = vld [vmem:[%s6 + $0xc] sm:$0xf]
    %v1949 = vpack.c.bf16 %v1944, %v1943
    %v1950 = vld [vmem:[#allocation11] sm:$0x1]
    %v1952 = vlaneseq
    %v1953 = vshrl.u32 %v1952, 7
    %v1954 = vsub.s32 0, %v1953
    %v1955 = vrot.slane %v1950, %v1954
    %v1961 = vunpack.c.l.b16 %v1945
    %v1962 = vunpack.c.l.b16 %v1946
    %v1963 = vunpack.c.l.b16 %v1947
    %v1964 = vunpack.c.l.b16 %v1948
    %v1965 = vpack.c.b16 %v1962, %v1961
    %v1966 = vpack.c.b16 %v1964, %v1963
    %v1970 = vsel %vm228, %v1949, 0
    %1972 = vmatprep.subr.bf16.mxu0 0
    %1973 = vmatpush1.bf16.msra.mxu0 %v1965
    %1974 = vmatprep.subr.bf16.mxu0 0
    %1975 = vmatpush1.bf16.msra.mxu0 %v1966
    %1976 = vmatprep.subr.bf16.mxu0 0
    %1977 = vmatpush1.bf16.msra.mxu0 0
    %1978 = vmatprep.subr.bf16.mxu0 0
    %1979 = vmatpush1.bf16.msra.mxu0 0
    %1980 = vmatprep.subr.bf16.mxu0 0
    %1981 = vmatpush1.bf16.msra.mxu0 0
    %1982 = vmatprep.subr.bf16.mxu0 0
    %1983 = vmatpush1.bf16.msra.mxu0 0
    %1984 = vmatprep.subr.bf16.mxu0 0
    %1985 = vmatpush1.bf16.msra.mxu0 0
    %1986 = vmatprep.subr.bf16.mxu0 0
    %1987 = vmatpush1.bf16.msra.mxu0 0
    %1988 = vmatprep.subr.bf16.mxu0 0
    %1989 = vmatpush1.bf16.msra.mxu0 0
    %1990 = vmatprep.subr.bf16.mxu0 0
    %1991 = vmatpush1.bf16.msra.mxu0 0
    %1992 = vmatprep.subr.bf16.mxu0 0
    %1993 = vmatpush1.bf16.msra.mxu0 0
    %1994 = vmatprep.subr.bf16.mxu0 0
    %1995 = vmatpush1.bf16.msra.mxu0 0
    %1996 = vmatprep.subr.bf16.mxu0 0
    %1997 = vmatpush1.bf16.msra.mxu0 0
    %1998 = vmatprep.subr.bf16.mxu0 0
    %1999 = vmatpush1.bf16.msra.mxu0 0
    %2000 = vmatprep.subr.bf16.mxu0 0
    %2001 = vmatpush1.bf16.msra.mxu0 0
    %2002 = vmatprep.subr.bf16.mxu0 0
    %2003 = vmatpush1.bf16.msra.mxu0 0
    %2004 = vmatprep.mubr.bf16.mxu0 0
    %2005 = vmatmul.mubr.bf16.gmra.mrb[0].mxu0 %v1970
    %v2006 = vpop.f32.mrb[0].mxu0
    %v2007 = vadd.f32 %v1955, %v2006
    %v2008 = vpop.f32.mrb[0].mxu0
    %v2009 = vpop.f32.mrb[0].mxu0
    %v2010 = vadd.f32 %v1955, %v2009
    %v2011 = vpop.f32.mrb[0].mxu0
    %2012 = vdwg.mxu0
    %2014 = vrot.lane.b32.xlu0 %v2007, 20
    %v2015 = vpop.permute.xlu0 %2014
    %vm2017 = vcmask 195744
    %2018 = vst.msk [vmem:[#allocation14] sm:$0xff] %vm2017, %v2015
    %2020 = vrot.lane.b32.xlu0 %v2010, 20
    %v2021 = vpop.permute.xlu0 %2020
    %2023 = vst.msk [vmem:[#allocation15] sm:$0xff] %vm2017, %v2021
    %2024 = vrot.lane.b32.xlu0 %v2007, 8
    %v2025 = vpop.permute.xlu0 %2024
    %2026 = vrot.lane.b32.xlu0 %v2010, 8
    %v2027 = vpop.permute.xlu0 %2026
    %2030 = vst.msk [vmem:[#allocation2] sm:$0xff] %vm1067, %v2025
    %2031 = vst.msk [vmem:[#allocation2 + $0x8] sm:$0xff] %vm1067, %v2027
    // Predicated region
    $region86: #{tpu_custom_call.1} parent=1 // pred_check
      _
    $region87: #{tpu_custom_call.1} parent=1 // pred_check_branch
      %2033 = sbr.rel (0) target = $region89
    $region88: #{tpu_custom_call.1} parent=1 // pred_region
      %s2035 = ssub.s32 128, 128
      %2036 = vsyncadd [#allocation5], %s2035
      %s2038 = sshll.u32 [#allocation14], 4
      %s2039 = int_to_ptr.vmem [resolvable:$true] %s2038
      %2041 = dma.vmem_to_hbm [thread:$0]  %s2039, 128, %s14, [#allocation5]
    $region89: #{tpu_custom_call.1} parent=1 // pred_fallthru
      _
    // Predicated region
    $region90: #{tpu_custom_call.1} parent=1 // pred_check
      _
    $region91: #{tpu_custom_call.1} parent=1 // pred_check_branch
      %2043 = sbr.rel (0) target = $region93
    $region92: #{tpu_custom_call.1} parent=1 // pred_region
      %s2045 = ssub.s32 128, 128
      %2046 = vsyncadd [#allocation16], %s2045
      %s2048 = sshll.u32 [#allocation15], 4
      %s2049 = int_to_ptr.vmem [resolvable:$true] %s2048
      %2051 = dma.vmem_to_hbm [thread:$0]  %s2049, 128, %s15, [#allocation16]
    $region93: #{tpu_custom_call.1} parent=1 // pred_fallthru
      _
    // Predicated region
    $region94: #{tpu_custom_call.1} parent=1 // pred_check
      _
    $region95: #{tpu_custom_call.1} parent=1 // pred_check_branch
      %2053 = sbr.rel (0) target = $region97
    $region96: #{tpu_custom_call.1} parent=1 // pred_region
      %2054 = dma.done [#allocation5], 128
    $region97: #{tpu_custom_call.1} parent=1 // pred_fallthru
      _
    // Predicated region
    $region98: #{tpu_custom_call.1} parent=1 // pred_check
      _
    $region99: #{tpu_custom_call.1} parent=1 // pred_check_branch
      %2056 = sbr.rel (0) target = $region101
    $region100: #{tpu_custom_call.1} parent=1 // pred_region
      %2057 = dma.done [#allocation16], 128
    $region101: #{tpu_custom_call.1} parent=1 // pred_fallthru
      _
    %2058 = vsyncpa [#allocation4], 1
    %2059 = vsyncpa [#allocation7], 1
    %2060 = vsyncpa [#allocation10], 1
    %2061 = vsyncpa [#allocation13], 1
    %2062 = vsyncpa [#allocation5], 1
    %2063 = vsyncpa [#allocation16], 1

</llo_original>
